<compile_context>
chip_gen: v6e
topology: v6e:2x2x1
jax: 0.10.0
libtpu: 0.0.40
codegen_flags: <defaults>
</compile_context>

<pallas_src>
import jax
import jax.numpy as jnp
import numpy as np
from jax.experimental import pallas as pl
from jax.experimental.pallas import tpu as pltpu


def _round_up(x, m):
    return ((x + m - 1) // m) * m


# ----------------------------------------------------------------------------
# Pallas kernel: add_on (1x1 convs) -> streamed L2 distance to prototypes
#                -> per-image spatial min, for a tile of images.
# ----------------------------------------------------------------------------
def _make_ppnet_kernel(acts, n_layers, b_tile, hw):
    """acts: tuple of 'relu'/'sigmoid' per add-on 1x1 conv."""

    def kernel(*refs):
        # refs = [feat, (wT_i, b_i) * n_layers, protos, p2, mind_out]
        feat_ref = refs[0]
        idx = 1

        # (C_in, B_TILE*HW) tile: channels on sublanes, positions on lanes.
        z = feat_ref[...].astype(jnp.float32)

        # add_on_layers: 1x1 convs == matmuls over the channel (sublane) axis.
        for i in range(n_layers):
            wT = refs[idx][...]          # (C_out, C_in)  (pre-transposed)
            b = refs[idx + 1][...]       # (C_out, 1)
            idx += 2
            z = jnp.dot(wT, z, preferred_element_type=jnp.float32) + b
            if acts[i] == "relu":
                z = jnp.maximum(z, 0.0)
            else:  # sigmoid
                z = jax.nn.sigmoid(z)

        protos = refs[idx][...]          # (P_pad, D)
        p2 = refs[idx + 1][...]          # (P_pad, 1)  precomputed sum(protos^2)
        mind_ref = refs[idx + 2]         # (1, P_pad, b_tile)

        # sum(x^2) over channels for every position of the tile (computed once).
        x2 = jnp.sum(z * z, axis=0, keepdims=True)                  # (1, BH)

        # _l2_convolution with 1x1 prototypes, streamed per image so the live
        # xp/dist temporaries are only (P_pad, hw):
        #   dist = relu( sum(x^2) - 2 <x, p> + sum(p^2) )
        for b_i in range(b_tile):
            lo, hi = b_i * hw, (b_i + 1) * hw                       # 128-aligned
            zc = z[:, lo:hi]                                        # (D, hw)
            xp = jnp.dot(protos, zc,
                         preferred_element_type=jnp.float32)        # (P_pad, hw)
            dist = jnp.maximum(x2[:, lo:hi] - 2.0 * xp + p2, 0.0)   # (P_pad, hw)
            # min over all spatial positions of this image
            # (== -max_pool2d(-dist, full-window)); store the column directly.
            col = jnp.min(dist, axis=1, keepdims=True)              # (P_pad, 1)
            mind_ref[0, :, b_i:b_i + 1] = col

    return kernel


# ----------------------------------------------------------------------------
# VMEM-budgeted batch-tile selection.
# ----------------------------------------------------------------------------
def _vmem_capacity_bytes():
    try:
        info = pltpu.get_tpu_info()
        cap = getattr(info, "vmem_capacity_bytes", None)
        if cap:
            return int(cap)
    except Exception:
        pass
    return 64 << 20  # conservative fallback (smallest per-core VMEM)


def _pick_b_tile(N, hw, c_feat, addon_channels, P_pad, budget_bytes):
    f32 = 4
    # Per-image cost (scales with b_tile):
    feat_per = 2 * c_feat * hw * f32                            # double-buffered feat tile
    z_per = max(ci + co for ci, co in addon_channels) * hw * f32  # live z in/out pair
    out_per = 2 * P_pad * f32                                   # double-buffered out block
    per_image = feat_per + z_per + out_per
    # Fixed cost (independent of b_tile):
    w_bytes = 2 * sum(ci * co + co for ci, co in addon_channels) * f32
    proto_bytes = 2 * (P_pad * addon_channels[-1][1] + P_pad) * f32
    dist_bytes = 3 * P_pad * hw * f32                           # xp + dist + slack (per image chunk)
    fixed = w_bytes + proto_bytes + dist_bytes + (2 << 20)
    avail = max(budget_bytes - fixed, per_image)

    # >= 2 grid steps per TensorCore on megacore parts, when the batch allows.
    if N >= 4:
        min_steps = 4
    elif N >= 2:
        min_steps = 2
    else:
        min_steps = 1

    best = 1
    for bt in range(1, N + 1):
        if N % bt or (N // bt) < min_steps:
            continue
        if bt * per_image <= avail:
            best = max(best, bt)
    return best


# ----------------------------------------------------------------------------
# Wrapper: pallas_call + tiny XLA epilogue (log-similarity + last linear).
# ----------------------------------------------------------------------------
def ppnet_pallas_forward(feat_cf, addon_params, acts, protos, last_w, epsilon,
                         hw, b_tile=None):
    """feat_cf: (C_feat, N*HW) float32, channel-major, columns ordered as
    n*HW + spatial_pos."""
    Cfeat, NHW = feat_cf.shape
    assert NHW % hw == 0
    assert hw % 128 == 0, "HW must be a multiple of 128 (pad spatially otherwise)"
    N = NHW // hw
    P, D = protos.shape
    n_layers = len(addon_params)

    # Pad prototype count to the sublane multiple (padded rows are zero and
    # sliced off below).
    P_pad = _round_up(max(P, 8), 8)
    protos_pad = protos if P_pad == P else jnp.pad(protos, ((0, P_pad - P), (0, 0)))

    # Grid-invariant precompute (done once here, not per grid step).
    wT_list = [w.T for (w, _b) in addon_params]                  # (C_out, C_in)
    bC_list = [b.reshape(-1, 1) for (_w, b) in addon_params]     # (C_out, 1)
    p2 = jnp.sum(protos_pad * protos_pad, axis=1, keepdims=True)  # (P_pad, 1)

    # VMEM-budgeted batch tile + scoped-VMEM limit.
    cap = _vmem_capacity_bytes()
    budget = (48 << 20) if cap >= (100 << 20) else (20 << 20)
    vmem_limit = int(min(budget + (16 << 20), max(cap - (4 << 20), 32 << 20)))

    addon_channels = [(w.shape[0], w.shape[1]) for (w, _b) in addon_params]
    if b_tile is None:
        b_tile = _pick_b_tile(N, hw, Cfeat, addon_channels, P_pad, budget)
    assert N % b_tile == 0
    G = N // b_tile
    BH = b_tile * hw

    kernel = _make_ppnet_kernel(tuple(acts), n_layers, b_tile, hw)

    in_specs = [pl.BlockSpec((Cfeat, BH), lambda g: (0, g))]
    flat_params = []
    for w_, b_ in zip(wT_list, bC_list):
        in_specs.append(pl.BlockSpec(w_.shape, lambda g: (0, 0)))
        in_specs.append(pl.BlockSpec(b_.shape, lambda g: (0, 0)))
        flat_params.extend([w_, b_])
    in_specs.append(pl.BlockSpec(protos_pad.shape, lambda g: (0, 0)))
    in_specs.append(pl.BlockSpec(p2.shape, lambda g: (0, 0)))

    out_shape = jax.ShapeDtypeStruct((G, P_pad, b_tile), jnp.float32)
    out_specs = pl.BlockSpec((1, P_pad, b_tile), lambda g: (g, 0, 0))

    mind_t = pl.pallas_call(
        kernel,
        out_shape=out_shape,
        grid=(G,),
        in_specs=in_specs,
        out_specs=out_specs,
        compiler_params=pltpu.CompilerParams(
            dimension_semantics=("parallel",),
            vmem_limit_bytes=vmem_limit),
    )(feat_cf, *flat_params, protos_pad, p2)

    # Tiny XLA epilogue on (N, P): distance_2_similarity + last_layer linear.
    min_d = jnp.transpose(mind_t, (0, 2, 1)).reshape(N, P_pad)[:, :P]
    sim = jnp.log((min_d + 1.0) / (min_d + epsilon))
    logits = sim @ last_w                                         # (N, NC)
    return logits, min_d


# ----------------------------------------------------------------------------
# Plain-JAX glue: synthetic `features` backbone (stand-in for VGG/ResNet conv
# stack).  Emits channel-major (C, N, H, W) directly so the kernel layout needs
# no extra transpose / HBM round trip.
# ----------------------------------------------------------------------------
def features_backbone(x_nchw, w_feat, b_feat):
    # TODO(synk): the real PPNet takes a full pretrained VGG/ResNet/DenseNet
    # backbone; here a single 3x3 conv + ReLU stands in for it (glue, not the
    # kernel hot path).
    y = jax.lax.conv_general_dilated(
        x_nchw, w_feat, window_strides=(1, 1), padding="SAME",
        dimension_numbers=("NCHW", "OIHW", "CNHW"))
    y = y + b_feat[:, None, None, None]
    return jnp.maximum(y, 0.0)          # (C_feat, N, H, W)


def build_addon_structure(first_in_channels, proto_dim):
    """Replicates the PyTorch 'bottleneck' add_on_layers construction loop."""
    layers = []   # list of (c_in, c_out, activation)
    cur_in = first_in_channels
    while cur_in > proto_dim or len(layers) == 0:
        cur_out = max(proto_dim, cur_in // 2)
        layers.append((cur_in, cur_out, "relu"))
        layers.append((cur_out, cur_out, "relu" if cur_out > proto_dim else "sigmoid"))
        cur_in = cur_in // 2
    return layers


# ----------------------------------------------------------------------------
# Pure-JAX reference (for correctness check of the Pallas kernel).
# ----------------------------------------------------------------------------
def ref_forward(feat_flat, addon_params, acts, protos, last_w, eps):
    z = feat_flat                                           # (N, HW, C)
    for (w, b), a in zip(addon_params, acts):
        z = jnp.einsum("nhc,cd->nhd", z, w) + b
        z = jnp.maximum(z, 0.0) if a == "relu" else jax.nn.sigmoid(z)
    x2 = jnp.sum(z * z, axis=-1, keepdims=True)
    xp = jnp.einsum("nhd,pd->nhp", z, protos)
    p2 = jnp.sum(protos * protos, axis=-1)
    dist = jnp.maximum(x2 - 2.0 * xp + p2[None, None, :], 0.0)
    min_d = jnp.min(dist, axis=1)
    sim = jnp.log((min_d + 1.0) / (min_d + eps))
    logits = sim @ last_w
    return logits, min_d


if __name__ == "__main__":
    # Small, shape-consistent instantiation of PPNet:
    #   image:     (N=8, 3, 16, 16)  NCHW
    #   features:  3 -> C_feat=32, spatial preserved (16x16)
    #   prototype_shape = (P=20, D=8, 1, 1), num_classes = 4  (5 protos/class)
    N, C_img, H, W = 8, 3, 16, 16
    C_feat = 32
    P, D = 20, 8
    NUM_CLASSES = 4
    EPSILON = 1e-4
    HW = H * W

    key = jax.random.PRNGKey(0)
    keys = jax.random.split(key, 16)

    # Input image
    x = jax.random.normal(keys[0], (N, C_img, H, W), dtype=jnp.float32)

    # Synthetic features backbone weights (3x3 conv, OIHW)
    w_feat = jax.random.normal(keys[1], (C_feat, C_img, 3, 3), jnp.float32) * 0.1
    b_feat = jnp.zeros((C_feat,), jnp.float32)

    # add_on_layers ('bottleneck'): 1x1 convs, kaiming-normal-ish init, bias 0
    structure = build_addon_structure(C_feat, D)
    addon_params = []
    acts = []
    for li, (cin, cout, act) in enumerate(structure):
        std = float(np.sqrt(2.0 / cout))  # kaiming_normal fan_out for 1x1 conv
        wk = jax.random.normal(keys[2 + li], (cin, cout), jnp.float32) * std
        bk = jnp.zeros((1, cout), jnp.float32)
        addon_params.append((wk, bk))
        acts.append(act)

    # prototype_vectors ~ U[0, 1), shape (P, D) (1x1 spatial squeezed out)
    protos = jax.random.uniform(keys[10], (P, D), jnp.float32)

    # last_layer: Linear(P -> NUM_CLASSES, bias=False); stored as (P, NC)
    bound = float(1.0 / np.sqrt(P))
    last_w = jax.random.uniform(keys[11], (P, NUM_CLASSES), jnp.float32,
                                minval=-bound, maxval=bound)

    # ---- forward ----
    feat_cnhw = features_backbone(x, w_feat, b_feat)             # (C_feat, N, H, W)
    feat_cf = feat_cnhw.reshape(C_feat, N * HW)                  # channel-major

    logits, min_distances = ppnet_pallas_forward(
        feat_cf, addon_params, acts, protos, last_w, EPSILON, HW)
    logits = jax.block_until_ready(logits)
    min_distances = jax.block_until_ready(min_distances)

    # correctness check against pure-JAX reference (original (N, HW, C) layout)
    feat_flat = jnp.transpose(feat_cnhw, (1, 2, 3, 0)).reshape(N, HW, C_feat)
    ref_logits, ref_mind = ref_forward(feat_flat, addon_params, acts, protos,
                                       last_w, EPSILON)
    np.testing.assert_allclose(np.asarray(logits), np.asarray(ref_logits),
                               rtol=1e-4, atol=1e-4)
    np.testing.assert_allclose(np.asarray(min_distances), np.asarray(ref_mind),
                               rtol=1e-4, atol=1e-4)

    assert logits.shape == (N, NUM_CLASSES)
    assert min_distances.shape == (N, P)
    print("KERNEL_OK")
</pallas_src>

<mosaic_0001>
module attributes {stable_mosaic.version = 11 : i64} {
  func.func @kernel(%arg0: i32, %arg1: memref<32x512xf32, #tpu.memory_space<vmem>>, %arg2: memref<16x32xf32, #tpu.memory_space<vmem>>, %arg3: memref<16x1xf32, #tpu.memory_space<vmem>>, %arg4: memref<16x16xf32, #tpu.memory_space<vmem>>, %arg5: memref<16x1xf32, #tpu.memory_space<vmem>>, %arg6: memref<8x16xf32, #tpu.memory_space<vmem>>, %arg7: memref<8x1xf32, #tpu.memory_space<vmem>>, %arg8: memref<8x8xf32, #tpu.memory_space<vmem>>, %arg9: memref<8x1xf32, #tpu.memory_space<vmem>>, %arg10: memref<24x8xf32, #tpu.memory_space<vmem>>, %arg11: memref<24x1xf32, #tpu.memory_space<vmem>>, %arg12: memref<1x24x2xf32, #tpu.memory_space<vmem>>) attributes {dimension_semantics = [#tpu.dimension_semantics<parallel>], iteration_bounds = array<i64: 4>, scalar_prefetch = 0 : i64, scratch_operands = 0 : i64, tpu.core_type = #tpu.core_type<tc>, window_params = [{transform_indices = @transform_0, window_bounds = array<i64: 32, 512>}, {pipeline_mode = #tpu.pipeline_mode<synchronous>, transform_indices = @transform_1, window_bounds = array<i64: 16, 32>}, {pipeline_mode = #tpu.pipeline_mode<synchronous>, transform_indices = @transform_2, window_bounds = array<i64: 16, 1>}, {pipeline_mode = #tpu.pipeline_mode<synchronous>, transform_indices = @transform_3, window_bounds = array<i64: 16, 16>}, {pipeline_mode = #tpu.pipeline_mode<synchronous>, transform_indices = @transform_4, window_bounds = array<i64: 16, 1>}, {pipeline_mode = #tpu.pipeline_mode<synchronous>, transform_indices = @transform_5, window_bounds = array<i64: 8, 16>}, {pipeline_mode = #tpu.pipeline_mode<synchronous>, transform_indices = @transform_6, window_bounds = array<i64: 8, 1>}, {pipeline_mode = #tpu.pipeline_mode<synchronous>, transform_indices = @transform_7, window_bounds = array<i64: 8, 8>}, {pipeline_mode = #tpu.pipeline_mode<synchronous>, transform_indices = @transform_8, window_bounds = array<i64: 8, 1>}, {pipeline_mode = #tpu.pipeline_mode<synchronous>, transform_indices = @transform_9, window_bounds = array<i64: 24, 8>}, {pipeline_mode = #tpu.pipeline_mode<synchronous>, transform_indices = @transform_10, window_bounds = array<i64: 24, 1>}, {transform_indices = @transform_11, window_bounds = array<i64: 1, 24, 2>}]} {
    %c0 = arith.constant 0 : index
    %c0_0 = arith.constant 0 : index
    %0 = vector.load %arg1[%c0, %c0_0] : memref<32x512xf32, #tpu.memory_space<vmem>>, vector<32x512xf32>
    %c0_1 = arith.constant 0 : index
    %c0_2 = arith.constant 0 : index
    %1 = vector.load %arg2[%c0_1, %c0_2] : memref<16x32xf32, #tpu.memory_space<vmem>>, vector<16x32xf32>
    %c0_3 = arith.constant 0 : index
    %c0_4 = arith.constant 0 : index
    %2 = vector.load %arg3[%c0_3, %c0_4] : memref<16x1xf32, #tpu.memory_space<vmem>>, vector<16x1xf32>
    %cst = arith.constant dense<0.000000e+00> : vector<16x512xf32>
    %3 = tpu.matmul %1, %0, %cst {dimension_numbers = #tpu.dot_dimension_numbers<[1], [0], [0], [1], [0, 0, 1, 1], [], []>} : vector<16x32xf32>, vector<32x512xf32>, vector<16x512xf32> -> vector<16x512xf32>
    %4 = vector.broadcast %2 : vector<16x1xf32> to vector<16x512xf32>
    %5 = arith.addf %3, %4 : vector<16x512xf32>
    %cst_5 = arith.constant 0.000000e+00 : f32
    %6 = vector.broadcast %cst_5 : f32 to vector<16x512xf32>
    %7 = arith.maximumf %5, %6 : vector<16x512xf32>
    %c0_6 = arith.constant 0 : index
    %c0_7 = arith.constant 0 : index
    %8 = vector.load %arg4[%c0_6, %c0_7] : memref<16x16xf32, #tpu.memory_space<vmem>>, vector<16x16xf32>
    %c0_8 = arith.constant 0 : index
    %c0_9 = arith.constant 0 : index
    %9 = vector.load %arg5[%c0_8, %c0_9] : memref<16x1xf32, #tpu.memory_space<vmem>>, vector<16x1xf32>
    %cst_10 = arith.constant dense<0.000000e+00> : vector<16x512xf32>
    %10 = tpu.matmul %8, %7, %cst_10 {dimension_numbers = #tpu.dot_dimension_numbers<[1], [0], [0], [1], [0, 0, 1, 1], [], []>} : vector<16x16xf32>, vector<16x512xf32>, vector<16x512xf32> -> vector<16x512xf32>
    %11 = vector.broadcast %9 : vector<16x1xf32> to vector<16x512xf32>
    %12 = arith.addf %10, %11 : vector<16x512xf32>
    %cst_11 = arith.constant 0.000000e+00 : f32
    %13 = vector.broadcast %cst_11 : f32 to vector<16x512xf32>
    %14 = arith.maximumf %12, %13 : vector<16x512xf32>
    %c0_12 = arith.constant 0 : index
    %c0_13 = arith.constant 0 : index
    %15 = vector.load %arg6[%c0_12, %c0_13] : memref<8x16xf32, #tpu.memory_space<vmem>>, vector<8x16xf32>
    %c0_14 = arith.constant 0 : index
    %c0_15 = arith.constant 0 : index
    %16 = vector.load %arg7[%c0_14, %c0_15] : memref<8x1xf32, #tpu.memory_space<vmem>>, vector<8x1xf32>
    %cst_16 = arith.constant dense<0.000000e+00> : vector<8x512xf32>
    %17 = tpu.matmul %15, %14, %cst_16 {dimension_numbers = #tpu.dot_dimension_numbers<[1], [0], [0], [1], [0, 0, 1, 1], [], []>} : vector<8x16xf32>, vector<16x512xf32>, vector<8x512xf32> -> vector<8x512xf32>
    %18 = vector.broadcast %16 : vector<8x1xf32> to vector<8x512xf32>
    %19 = arith.addf %17, %18 : vector<8x512xf32>
    %cst_17 = arith.constant 0.000000e+00 : f32
    %20 = vector.broadcast %cst_17 : f32 to vector<8x512xf32>
    %21 = arith.maximumf %19, %20 : vector<8x512xf32>
    %c0_18 = arith.constant 0 : index
    %c0_19 = arith.constant 0 : index
    %22 = vector.load %arg8[%c0_18, %c0_19] : memref<8x8xf32, #tpu.memory_space<vmem>>, vector<8x8xf32>
    %c0_20 = arith.constant 0 : index
    %c0_21 = arith.constant 0 : index
    %23 = vector.load %arg9[%c0_20, %c0_21] : memref<8x1xf32, #tpu.memory_space<vmem>>, vector<8x1xf32>
    %cst_22 = arith.constant dense<0.000000e+00> : vector<8x512xf32>
    %24 = tpu.matmul %22, %21, %cst_22 {dimension_numbers = #tpu.dot_dimension_numbers<[1], [0], [0], [1], [0, 0, 1, 1], [], []>} : vector<8x8xf32>, vector<8x512xf32>, vector<8x512xf32> -> vector<8x512xf32>
    %25 = vector.broadcast %23 : vector<8x1xf32> to vector<8x512xf32>
    %26 = arith.addf %24, %25 : vector<8x512xf32>
    %27 = arith.negf %26 : vector<8x512xf32>
    %28 = math.exp %27 : vector<8x512xf32>
    %cst_23 = arith.constant 1.000000e+00 : f32
    %29 = vector.broadcast %cst_23 : f32 to vector<8x512xf32>
    %30 = arith.addf %29, %28 : vector<8x512xf32>
    %31 = arith.divf %29, %30 : vector<8x512xf32>
    %c0_24 = arith.constant 0 : index
    %c0_25 = arith.constant 0 : index
    %32 = vector.load %arg10[%c0_24, %c0_25] : memref<24x8xf32, #tpu.memory_space<vmem>>, vector<24x8xf32>
    %c0_26 = arith.constant 0 : index
    %c0_27 = arith.constant 0 : index
    %33 = vector.load %arg11[%c0_26, %c0_27] : memref<24x1xf32, #tpu.memory_space<vmem>>, vector<24x1xf32>
    %34 = arith.mulf %31, %31 : vector<8x512xf32>
    %cst_28 = arith.constant dense<0.000000e+00> : vector<512xf32>
    %35 = vector.multi_reduction <add>, %34, %cst_28 [0] : vector<8x512xf32> to vector<512xf32>
    %36 = vector.shape_cast %35 : vector<512xf32> to vector<1x512xf32>
    %37 = vector.extract_strided_slice %31 {offsets = [0, 0], sizes = [8, 256], strides = [1, 1]} : vector<8x512xf32> to vector<8x256xf32>
    %cst_29 = arith.constant dense<0.000000e+00> : vector<24x256xf32>
    %38 = tpu.matmul %32, %37, %cst_29 {dimension_numbers = #tpu.dot_dimension_numbers<[1], [0], [0], [1], [0, 0, 1, 1], [], []>} : vector<24x8xf32>, vector<8x256xf32>, vector<24x256xf32> -> vector<24x256xf32>
    %39 = vector.extract_strided_slice %36 {offsets = [0, 0], sizes = [1, 256], strides = [1, 1]} : vector<1x512xf32> to vector<1x256xf32>
    %cst_30 = arith.constant 2.000000e+00 : f32
    %40 = vector.broadcast %cst_30 : f32 to vector<24x256xf32>
    %41 = arith.mulf %40, %38 : vector<24x256xf32>
    %42 = vector.broadcast %39 : vector<1x256xf32> to vector<24x256xf32>
    %43 = arith.subf %42, %41 : vector<24x256xf32>
    %44 = vector.broadcast %33 : vector<24x1xf32> to vector<24x256xf32>
    %45 = arith.addf %43, %44 : vector<24x256xf32>
    %cst_31 = arith.constant 0.000000e+00 : f32
    %46 = vector.broadcast %cst_31 : f32 to vector<24x256xf32>
    %47 = arith.maximumf %45, %46 : vector<24x256xf32>
    %cst_32 = arith.constant dense<0x7F800000> : vector<24xf32>
    %48 = vector.multi_reduction <minimumf>, %47, %cst_32 [1] : vector<24x256xf32> to vector<24xf32>
    %49 = vector.shape_cast %48 : vector<24xf32> to vector<24x1xf32>
    %c0_33 = arith.constant 0 : index
    %c0_34 = arith.constant 0 : index
    %c0_35 = arith.constant 0 : index
    %50 = vector.load %arg12[%c0_33, %c0_34, %c0_35] : memref<1x24x2xf32, #tpu.memory_space<vmem>>, vector<1x24x1xf32>
    %51 = vector.shape_cast %50 : vector<1x24x1xf32> to vector<24x1xf32>
    %52 = vector.shape_cast %49 : vector<24x1xf32> to vector<1x24x1xf32>
    tpu.vector_store %arg12[%c0_33, %c0_34, %c0_35], %52 {strides = array<i32>} : memref<1x24x2xf32, #tpu.memory_space<vmem>>, vector<1x24x1xf32>,
    %53 = vector.extract_strided_slice %31 {offsets = [0, 256], sizes = [8, 256], strides = [1, 1]} : vector<8x512xf32> to vector<8x256xf32>
    %cst_36 = arith.constant dense<0.000000e+00> : vector<24x256xf32>
    %54 = tpu.matmul %32, %53, %cst_36 {dimension_numbers = #tpu.dot_dimension_numbers<[1], [0], [0], [1], [0, 0, 1, 1], [], []>} : vector<24x8xf32>, vector<8x256xf32>, vector<24x256xf32> -> vector<24x256xf32>
    %55 = vector.extract_strided_slice %36 {offsets = [0, 256], sizes = [1, 256], strides = [1, 1]} : vector<1x512xf32> to vector<1x256xf32>
    %cst_37 = arith.constant 2.000000e+00 : f32
    %56 = vector.broadcast %cst_37 : f32 to vector<24x256xf32>
    %57 = arith.mulf %56, %54 : vector<24x256xf32>
    %58 = vector.broadcast %55 : vector<1x256xf32> to vector<24x256xf32>
    %59 = arith.subf %58, %57 : vector<24x256xf32>
    %60 = vector.broadcast %33 : vector<24x1xf32> to vector<24x256xf32>
    %61 = arith.addf %59, %60 : vector<24x256xf32>
    %cst_38 = arith.constant 0.000000e+00 : f32
    %62 = vector.broadcast %cst_38 : f32 to vector<24x256xf32>
    %63 = arith.maximumf %61, %62 : vector<24x256xf32>
    %cst_39 = arith.constant dense<0x7F800000> : vector<24xf32>
    %64 = vector.multi_reduction <minimumf>, %63, %cst_39 [1] : vector<24x256xf32> to vector<24xf32>
    %65 = vector.shape_cast %64 : vector<24xf32> to vector<24x1xf32>
    %c0_40 = arith.constant 0 : index
    %c0_41 = arith.constant 0 : index
    %c1 = arith.constant 1 : index
    %66 = vector.load %arg12[%c0_40, %c0_41, %c1] : memref<1x24x2xf32, #tpu.memory_space<vmem>>, vector<1x24x1xf32>
    %67 = vector.shape_cast %66 : vector<1x24x1xf32> to vector<24x1xf32>
    %68 = vector.shape_cast %65 : vector<24x1xf32> to vector<1x24x1xf32>
    tpu.vector_store %arg12[%c0_40, %c0_41, %c1], %68 {strides = array<i32>} : memref<1x24x2xf32, #tpu.memory_space<vmem>>, vector<1x24x1xf32>,
    return
  }
  func.func @transform_0(%arg0: i32) -> (i32, i32) {
    %c0_i32 = arith.constant 0 : i32
    %c0_i32_0 = arith.constant 0 : i32
    return %c0_i32, %arg0 : i32, i32
  }
  func.func @transform_1(%arg0: i32) -> (i32, i32) {
    %c0_i32 = arith.constant 0 : i32
    %c0_i32_0 = arith.constant 0 : i32
    %c0_i32_1 = arith.constant 0 : i32
    return %c0_i32, %c0_i32_0 : i32, i32
  }
  func.func @transform_2(%arg0: i32) -> (i32, i32) {
    %c0_i32 = arith.constant 0 : i32
    %c0_i32_0 = arith.constant 0 : i32
    %c0_i32_1 = arith.constant 0 : i32
    return %c0_i32, %c0_i32_0 : i32, i32
  }
  func.func @transform_3(%arg0: i32) -> (i32, i32) {
    %c0_i32 = arith.constant 0 : i32
    %c0_i32_0 = arith.constant 0 : i32
    %c0_i32_1 = arith.constant 0 : i32
    return %c0_i32, %c0_i32_0 : i32, i32
  }
  func.func @transform_4(%arg0: i32) -> (i32, i32) {
    %c0_i32 = arith.constant 0 : i32
    %c0_i32_0 = arith.constant 0 : i32
    %c0_i32_1 = arith.constant 0 : i32
    return %c0_i32, %c0_i32_0 : i32, i32
  }
  func.func @transform_5(%arg0: i32) -> (i32, i32) {
    %c0_i32 = arith.constant 0 : i32
    %c0_i32_0 = arith.constant 0 : i32
    %c0_i32_1 = arith.constant 0 : i32
    return %c0_i32, %c0_i32_0 : i32, i32
  }
  func.func @transform_6(%arg0: i32) -> (i32, i32) {
    %c0_i32 = arith.constant 0 : i32
    %c0_i32_0 = arith.constant 0 : i32
    %c0_i32_1 = arith.constant 0 : i32
    return %c0_i32, %c0_i32_0 : i32, i32
  }
  func.func @transform_7(%arg0: i32) -> (i32, i32) {
    %c0_i32 = arith.constant 0 : i32
    %c0_i32_0 = arith.constant 0 : i32
    %c0_i32_1 = arith.constant 0 : i32
    return %c0_i32, %c0_i32_0 : i32, i32
  }
  func.func @transform_8(%arg0: i32) -> (i32, i32) {
    %c0_i32 = arith.constant 0 : i32
    %c0_i32_0 = arith.constant 0 : i32
    %c0_i32_1 = arith.constant 0 : i32
    return %c0_i32, %c0_i32_0 : i32, i32
  }
  func.func @transform_9(%arg0: i32) -> (i32, i32) {
    %c0_i32 = arith.constant 0 : i32
    %c0_i32_0 = arith.constant 0 : i32
    %c0_i32_1 = arith.constant 0 : i32
    return %c0_i32, %c0_i32_0 : i32, i32
  }
  func.func @transform_10(%arg0: i32) -> (i32, i32) {
    %c0_i32 = arith.constant 0 : i32
    %c0_i32_0 = arith.constant 0 : i32
    %c0_i32_1 = arith.constant 0 : i32
    return %c0_i32, %c0_i32_0 : i32, i32
  }
  func.func @transform_11(%arg0: i32) -> (i32, i32, i32) {
    %c0_i32 = arith.constant 0 : i32
    %c0_i32_0 = arith.constant 0 : i32
    %c0_i32_1 = arith.constant 0 : i32
    return %arg0, %c0_i32, %c0_i32_0 : i32, i32, i32
  }
}

</mosaic_0001>

<llo_original>
// kernel: tpu_custom_call.1
$region0: #{tpu_custom_call.1}
  #allocation0 [shape = 'u32[]', space=smem, size = 0x4, offset = 0x4, fixed_abs, tag = 'smem constant byte address 0x4 - core index']
  #allocation1 [shape = 'u32[144,128]{1,0:T(1,128)}', space=vmem, size = 0x12000, scoped, tag = 'internal scratch']
  %s0 = inlined_call_operand.hbm [shape: f32[32,2048], index: 0, kind: input, shape index: {}]
  %s1 = inlined_call_operand.vmem [shape: f32[16,32], index: 1, kind: input, shape index: {}]
  %s2 = inlined_call_operand.vmem [shape: f32[16,1], index: 2, kind: input, shape index: {}]
  %s3 = inlined_call_operand.vmem [shape: f32[16,16], index: 3, kind: input, shape index: {}]
  %s4 = inlined_call_operand.vmem [shape: f32[16,1], index: 4, kind: input, shape index: {}]
  %s5 = inlined_call_operand.vmem [shape: f32[8,16], index: 5, kind: input, shape index: {}]
  %s6 = inlined_call_operand.vmem [shape: f32[8,1], index: 6, kind: input, shape index: {}]
  %s7 = inlined_call_operand.vmem [shape: f32[8,8], index: 7, kind: input, shape index: {}]
  %s8 = inlined_call_operand.vmem [shape: f32[8,1], index: 8, kind: input, shape index: {}]
  %s9 = inlined_call_operand.vmem [shape: f32[24,8], index: 9, kind: input, shape index: {}]
  %s10 = inlined_call_operand.vmem [shape: f32[24,1], index: 10, kind: input, shape index: {}]
  %s11 = inlined_call_operand.vmem [shape: f32[4,24,2], index: 11, kind: output, shape index: {}]
  %s12 = sld [smem:[#allocation0]]
  $region81: #{tpu_custom_call.1} parent=0
    _
  %s14 = ssub.s32 1, %s12
  %s15 = scalar_select 0, %s14, %s12
  $region1: #{tpu_custom_call.1} parent=0
    #allocation2 [shape = 'u8[131072]{0}', space=vmem, size = 0x20000, scoped, tag = 'input window, operand 0']
    #allocation3 [shape = 's32[2]{0}', space=sflag, size = 0x8, scoped, tag = 'scoped memory for tpu_custom_call.1']
    %16 = vsyncpa [#allocation3], 0
    %s17 = scalar_lea.sflag [#allocation3], 1
    %18 = vsyncpa %s17, 0
    loop: start=0, step=1, limit=6
    $region2: #{tpu_custom_call.1} parent=1 // loop_pre_header
      _
    $region3: #{tpu_custom_call.1} parent=1 // loop_header
      %s20 = sphi 0, %s24
      %p21 = scmp.ge.s32.totalorder %s20, 6
      %s30 = sphi 0, %s32
      %s33 = sphi 0, %s30
      %s34 = sphi 0, %s33
      %s50 = sphi 0, %s34
      %s54 = sphi 0, %s54
      %s56 = sphi 0, %s54
      %s57 = sphi 0, %s56
      %s71 = sphi 0, %s57
      %s75 = sphi 0, %s75
      %s77 = sphi 0, %s75
      %s78 = sphi 0, %s77
      %s92 = sphi 0, %s78
      %s96 = sphi 0, %s96
      %s98 = sphi 0, %s96
      %s99 = sphi 0, %s98
      %s113 = sphi 0, %s99
      %s117 = sphi 0, %s117
      %s119 = sphi 0, %s117
      %s120 = sphi 0, %s119
      %s134 = sphi 0, %s120
      %s138 = sphi 0, %s138
      %s140 = sphi 0, %s138
      %s141 = sphi 0, %s140
      %s155 = sphi 0, %s141
      %s159 = sphi 0, %s159
      %s161 = sphi 0, %s159
      %s162 = sphi 0, %s161
      %s176 = sphi 0, %s162
      %s180 = sphi 0, %s180
      %s182 = sphi 0, %s180
      %s183 = sphi 0, %s182
      %s197 = sphi 0, %s183
      %s201 = sphi 0, %s201
      %s203 = sphi 0, %s201
      %s204 = sphi 0, %s203
      %s218 = sphi 0, %s204
      %s222 = sphi 0, %s222
      %s224 = sphi 0, %s222
      %s225 = sphi 0, %s224
      %s239 = sphi 0, %s225
      %s243 = sphi 0, %s243
      %s245 = sphi 0, %s243
      %s246 = sphi 0, %s245
      %s260 = sphi 0, %s246
      %s266 = sphi 0, %s268
      %s269 = sphi 0, %s266
      %s270 = sphi 0, %s269
      %s286 = sphi 0, %s270
    $region4: #{tpu_custom_call.1} parent=1 // loop_header_branch
      %23 = sbr.rel (%p21) target = $region8
    $region5: #{tpu_custom_call.1} parent=1 // loop_body
      %s25 = ssub.s32 %s20, 1
      %s26 = ssub.s32 %s20, 2
      %s27 = sadd.s32 %s20, 1
      %s28 = ssub.s32 %s20, %s27
      %p29 = scmp.eq.s32.totalorder %s28, 0
      %s31 = sadd.s32 %s30, 1
      %s32 = scalar_select %p29, %s30, %s31
      %p35 = pneg %p29
      %p36 = scmp.eq.s32.totalorder %s20, 3
      %p37 = por %p35, %p36
      %p38 = scmp.ne.s32.totalorder %s30, %s33
      %p39 = scmp.eq.s32.totalorder %s20, 0
      %p40 = por %p38, %p39
      %p41 = scmp.ne.s32.totalorder %s30, %s33
      %p42 = scmp.eq.s32.totalorder %s25, 3
      %p43 = por %p41, %p42
      %p44 = scmp.ne.s32.totalorder %s33, %s34
      %p45 = scmp.eq.s32.totalorder %s25, 0
      %p46 = por %p44, %p45
      %p47 = scmp.ne.s32.totalorder %s33, %s34
      %p48 = scmp.eq.s32.totalorder %s26, 3
      %p49 = por %p47, %p48
      %p51 = scmp.ne.s32.totalorder %s34, %s50
      %p52 = scmp.eq.s32.totalorder %s26, 0
      %p53 = por %p51, %p52
      %s55 = sadd.s32 %s54, 1
      %p58 = scmp.eq.s32.totalorder %s20, 3
      %p59 = scmp.ne.s32.totalorder %s54, %s56
      %p60 = scmp.eq.s32.totalorder %s20, 0
      %p61 = por %p59, %p60
      %p62 = scmp.ne.s32.totalorder %s54, %s56
      %p63 = scmp.eq.s32.totalorder %s25, 3
      %p64 = por %p62, %p63
      %p65 = scmp.ne.s32.totalorder %s56, %s57
      %p66 = scmp.eq.s32.totalorder %s25, 0
      %p67 = por %p65, %p66
      %p68 = scmp.ne.s32.totalorder %s56, %s57
      %p69 = scmp.eq.s32.totalorder %s26, 3
      %p70 = por %p68, %p69
      %p72 = scmp.ne.s32.totalorder %s57, %s71
      %p73 = scmp.eq.s32.totalorder %s26, 0
      %p74 = por %p72, %p73
      %s76 = sadd.s32 %s75, 1
      %p79 = scmp.eq.s32.totalorder %s20, 3
      %p80 = scmp.ne.s32.totalorder %s75, %s77
      %p81 = scmp.eq.s32.totalorder %s20, 0
      %p82 = por %p80, %p81
      %p83 = scmp.ne.s32.totalorder %s75, %s77
      %p84 = scmp.eq.s32.totalorder %s25, 3
      %p85 = por %p83, %p84
      %p86 = scmp.ne.s32.totalorder %s77, %s78
      %p87 = scmp.eq.s32.totalorder %s25, 0
      %p88 = por %p86, %p87
      %p89 = scmp.ne.s32.totalorder %s77, %s78
      %p90 = scmp.eq.s32.totalorder %s26, 3
      %p91 = por %p89, %p90
      %p93 = scmp.ne.s32.totalorder %s78, %s92
      %p94 = scmp.eq.s32.totalorder %s26, 0
      %p95 = por %p93, %p94
      %s97 = sadd.s32 %s96, 1
      %p100 = scmp.eq.s32.totalorder %s20, 3
      %p101 = scmp.ne.s32.totalorder %s96, %s98
      %p102 = scmp.eq.s32.totalorder %s20, 0
      %p103 = por %p101, %p102
      %p104 = scmp.ne.s32.totalorder %s96, %s98
      %p105 = scmp.eq.s32.totalorder %s25, 3
      %p106 = por %p104, %p105
      %p107 = scmp.ne.s32.totalorder %s98, %s99
      %p108 = scmp.eq.s32.totalorder %s25, 0
      %p109 = por %p107, %p108
      %p110 = scmp.ne.s32.totalorder %s98, %s99
      %p111 = scmp.eq.s32.totalorder %s26, 3
      %p112 = por %p110, %p111
      %p114 = scmp.ne.s32.totalorder %s99, %s113
      %p115 = scmp.eq.s32.totalorder %s26, 0
      %p116 = por %p114, %p115
      %s118 = sadd.s32 %s117, 1
      %p121 = scmp.eq.s32.totalorder %s20, 3
      %p122 = scmp.ne.s32.totalorder %s117, %s119
      %p123 = scmp.eq.s32.totalorder %s20, 0
      %p124 = por %p122, %p123
      %p125 = scmp.ne.s32.totalorder %s117, %s119
      %p126 = scmp.eq.s32.totalorder %s25, 3
      %p127 = por %p125, %p126
      %p128 = scmp.ne.s32.totalorder %s119, %s120
      %p129 = scmp.eq.s32.totalorder %s25, 0
      %p130 = por %p128, %p129
      %p131 = scmp.ne.s32.totalorder %s119, %s120
      %p132 = scmp.eq.s32.totalorder %s26, 3
      %p133 = por %p131, %p132
      %p135 = scmp.ne.s32.totalorder %s120, %s134
      %p136 = scmp.eq.s32.totalorder %s26, 0
      %p137 = por %p135, %p136
      %s139 = sadd.s32 %s138, 1
      %p142 = scmp.eq.s32.totalorder %s20, 3
      %p143 = scmp.ne.s32.totalorder %s138, %s140
      %p144 = scmp.eq.s32.totalorder %s20, 0
      %p145 = por %p143, %p144
      %p146 = scmp.ne.s32.totalorder %s138, %s140
      %p147 = scmp.eq.s32.totalorder %s25, 3
      %p148 = por %p146, %p147
      %p149 = scmp.ne.s32.totalorder %s140, %s141
      %p150 = scmp.eq.s32.totalorder %s25, 0
      %p151 = por %p149, %p150
      %p152 = scmp.ne.s32.totalorder %s140, %s141
      %p153 = scmp.eq.s32.totalorder %s26, 3
      %p154 = por %p152, %p153
      %p156 = scmp.ne.s32.totalorder %s141, %s155
      %p157 = scmp.eq.s32.totalorder %s26, 0
      %p158 = por %p156, %p157
      %s160 = sadd.s32 %s159, 1
      %p163 = scmp.eq.s32.totalorder %s20, 3
      %p164 = scmp.ne.s32.totalorder %s159, %s161
      %p165 = scmp.eq.s32.totalorder %s20, 0
      %p166 = por %p164, %p165
      %p167 = scmp.ne.s32.totalorder %s159, %s161
      %p168 = scmp.eq.s32.totalorder %s25, 3
      %p169 = por %p167, %p168
      %p170 = scmp.ne.s32.totalorder %s161, %s162
      %p171 = scmp.eq.s32.totalorder %s25, 0
      %p172 = por %p170, %p171
      %p173 = scmp.ne.s32.totalorder %s161, %s162
      %p174 = scmp.eq.s32.totalorder %s26, 3
      %p175 = por %p173, %p174
      %p177 = scmp.ne.s32.totalorder %s162, %s176
      %p178 = scmp.eq.s32.totalorder %s26, 0
      %p179 = por %p177, %p178
      %s181 = sadd.s32 %s180, 1
      %p184 = scmp.eq.s32.totalorder %s20, 3
      %p185 = scmp.ne.s32.totalorder %s180, %s182
      %p186 = scmp.eq.s32.totalorder %s20, 0
      %p187 = por %p185, %p186
      %p188 = scmp.ne.s32.totalorder %s180, %s182
      %p189 = scmp.eq.s32.totalorder %s25, 3
      %p190 = por %p188, %p189
      %p191 = scmp.ne.s32.totalorder %s182, %s183
      %p192 = scmp.eq.s32.totalorder %s25, 0
      %p193 = por %p191, %p192
      %p194 = scmp.ne.s32.totalorder %s182, %s183
      %p195 = scmp.eq.s32.totalorder %s26, 3
      %p196 = por %p194, %p195
      %p198 = scmp.ne.s32.totalorder %s183, %s197
      %p199 = scmp.eq.s32.totalorder %s26, 0
      %p200 = por %p198, %p199
      %s202 = sadd.s32 %s201, 1
      %p205 = scmp.eq.s32.totalorder %s20, 3
      %p206 = scmp.ne.s32.totalorder %s201, %s203
      %p207 = scmp.eq.s32.totalorder %s20, 0
      %p208 = por %p206, %p207
      %p209 = scmp.ne.s32.totalorder %s201, %s203
      %p210 = scmp.eq.s32.totalorder %s25, 3
      %p211 = por %p209, %p210
      %p212 = scmp.ne.s32.totalorder %s203, %s204
      %p213 = scmp.eq.s32.totalorder %s25, 0
      %p214 = por %p212, %p213
      %p215 = scmp.ne.s32.totalorder %s203, %s204
      %p216 = scmp.eq.s32.totalorder %s26, 3
      %p217 = por %p215, %p216
      %p219 = scmp.ne.s32.totalorder %s204, %s218
      %p220 = scmp.eq.s32.totalorder %s26, 0
      %p221 = por %p219, %p220
      %s223 = sadd.s32 %s222, 1
      %p226 = scmp.eq.s32.totalorder %s20, 3
      %p227 = scmp.ne.s32.totalorder %s222, %s224
      %p228 = scmp.eq.s32.totalorder %s20, 0
      %p229 = por %p227, %p228
      %p230 = scmp.ne.s32.totalorder %s222, %s224
      %p231 = scmp.eq.s32.totalorder %s25, 3
      %p232 = por %p230, %p231
      %p233 = scmp.ne.s32.totalorder %s224, %s225
      %p234 = scmp.eq.s32.totalorder %s25, 0
      %p235 = por %p233, %p234
      %p236 = scmp.ne.s32.totalorder %s224, %s225
      %p237 = scmp.eq.s32.totalorder %s26, 3
      %p238 = por %p236, %p237
      %p240 = scmp.ne.s32.totalorder %s225, %s239
      %p241 = scmp.eq.s32.totalorder %s26, 0
      %p242 = por %p240, %p241
      %s244 = sadd.s32 %s243, 1
      %p247 = scmp.eq.s32.totalorder %s20, 3
      %p248 = scmp.ne.s32.totalorder %s243, %s245
      %p249 = scmp.eq.s32.totalorder %s20, 0
      %p250 = por %p248, %p249
      %p251 = scmp.ne.s32.totalorder %s243, %s245
      %p252 = scmp.eq.s32.totalorder %s25, 3
      %p253 = por %p251, %p252
      %p254 = scmp.ne.s32.totalorder %s245, %s246
      %p255 = scmp.eq.s32.totalorder %s25, 0
      %p256 = por %p254, %p255
      %p257 = scmp.ne.s32.totalorder %s245, %s246
      %p258 = scmp.eq.s32.totalorder %s26, 3
      %p259 = por %p257, %p258
      %p261 = scmp.ne.s32.totalorder %s246, %s260
      %p262 = scmp.eq.s32.totalorder %s26, 0
      %p263 = por %p261, %p262
      %s264 = ssub.s32 %s20, %s27
      %p265 = scmp.eq.s32.totalorder %s264, 0
      %s267 = sadd.s32 %s266, 1
      %s268 = scalar_select %p265, %s266, %s267
      %p271 = pneg %p265
      %p272 = scmp.eq.s32.totalorder %s20, 3
      %p273 = por %p271, %p272
      %p274 = scmp.ne.s32.totalorder %s266, %s269
      %p275 = scmp.eq.s32.totalorder %s20, 0
      %p276 = por %p274, %p275
      %p277 = scmp.ne.s32.totalorder %s266, %s269
      %p278 = scmp.eq.s32.totalorder %s25, 3
      %p279 = por %p277, %p278
      %p280 = scmp.ne.s32.totalorder %s269, %s270
      %p281 = scmp.eq.s32.totalorder %s25, 0
      %p282 = por %p280, %p281
      %p283 = scmp.ne.s32.totalorder %s269, %s270
      %p284 = scmp.eq.s32.totalorder %s26, 3
      %p285 = por %p283, %p284
      %p287 = scmp.ne.s32.totalorder %s270, %s286
      %p288 = scmp.eq.s32.totalorder %s26, 0
      %p289 = por %p287, %p288
      %p290 = scmp.le.s32.totalorder 1, %s20
      %p291 = scmp.lt.s32.totalorder %s20, 5
      %p292 = pnand %p290, %p291
      %p293 = pneg %p292
      // Predicated region
      $region9: #{tpu_custom_call.1} parent=5 // pred_check
        _
      $region10: #{tpu_custom_call.1} parent=5 // pred_check_branch
        %295 = sbr.rel (%p292) target = $region12
      $region11: #{tpu_custom_call.1} parent=5 // pred_region
        %s296 = ssub.s32 %s20, 1
        // Predicated region
        $region13: #{tpu_custom_call.1} parent=11 // pred_check
          %p297 = pneg %p67
        $region14: #{tpu_custom_call.1} parent=11 // pred_check_branch
          %299 = sbr.rel (%p297) target = $region16
        $region15: #{tpu_custom_call.1} parent=11 // pred_region
          _
        $region16: #{tpu_custom_call.1} parent=11 // pred_fallthru
          _
        // Predicated region
        $region17: #{tpu_custom_call.1} parent=11 // pred_check
          %p300 = pneg %p88
        $region18: #{tpu_custom_call.1} parent=11 // pred_check_branch
          %302 = sbr.rel (%p300) target = $region20
        $region19: #{tpu_custom_call.1} parent=11 // pred_region
          _
        $region20: #{tpu_custom_call.1} parent=11 // pred_fallthru
          _
        // Predicated region
        $region21: #{tpu_custom_call.1} parent=11 // pred_check
          %p303 = pneg %p109
        $region22: #{tpu_custom_call.1} parent=11 // pred_check_branch
          %305 = sbr.rel (%p303) target = $region24
        $region23: #{tpu_custom_call.1} parent=11 // pred_region
          _
        $region24: #{tpu_custom_call.1} parent=11 // pred_fallthru
          _
        // Predicated region
        $region25: #{tpu_custom_call.1} parent=11 // pred_check
          %p306 = pneg %p130
        $region26: #{tpu_custom_call.1} parent=11 // pred_check_branch
          %308 = sbr.rel (%p306) target = $region28
        $region27: #{tpu_custom_call.1} parent=11 // pred_region
          _
        $region28: #{tpu_custom_call.1} parent=11 // pred_fallthru
          _
        // Predicated region
        $region29: #{tpu_custom_call.1} parent=11 // pred_check
          %p309 = pneg %p151
        $region30: #{tpu_custom_call.1} parent=11 // pred_check_branch
          %311 = sbr.rel (%p309) target = $region32
        $region31: #{tpu_custom_call.1} parent=11 // pred_region
          _
        $region32: #{tpu_custom_call.1} parent=11 // pred_fallthru
          _
        // Predicated region
        $region33: #{tpu_custom_call.1} parent=11 // pred_check
          %p312 = pneg %p172
        $region34: #{tpu_custom_call.1} parent=11 // pred_check_branch
          %314 = sbr.rel (%p312) target = $region36
        $region35: #{tpu_custom_call.1} parent=11 // pred_region
          _
        $region36: #{tpu_custom_call.1} parent=11 // pred_fallthru
          _
        // Predicated region
        $region37: #{tpu_custom_call.1} parent=11 // pred_check
          %p315 = pneg %p193
        $region38: #{tpu_custom_call.1} parent=11 // pred_check_branch
          %317 = sbr.rel (%p315) target = $region40
        $region39: #{tpu_custom_call.1} parent=11 // pred_region
          _
        $region40: #{tpu_custom_call.1} parent=11 // pred_fallthru
          _
        // Predicated region
        $region41: #{tpu_custom_call.1} parent=11 // pred_check
          %p318 = pneg %p214
        $region42: #{tpu_custom_call.1} parent=11 // pred_check_branch
          %320 = sbr.rel (%p318) target = $region44
        $region43: #{tpu_custom_call.1} parent=11 // pred_region
          _
        $region44: #{tpu_custom_call.1} parent=11 // pred_fallthru
          _
        // Predicated region
        $region45: #{tpu_custom_call.1} parent=11 // pred_check
          %p321 = pneg %p235
        $region46: #{tpu_custom_call.1} parent=11 // pred_check_branch
          %323 = sbr.rel (%p321) target = $region48
        $region47: #{tpu_custom_call.1} parent=11 // pred_region
          _
        $region48: #{tpu_custom_call.1} parent=11 // pred_fallthru
          _
        // Predicated region
        $region49: #{tpu_custom_call.1} parent=11 // pred_check
          %p324 = pneg %p256
        $region50: #{tpu_custom_call.1} parent=11 // pred_check_branch
          %326 = sbr.rel (%p324) target = $region52
        $region51: #{tpu_custom_call.1} parent=11 // pred_region
          _
        $region52: #{tpu_custom_call.1} parent=11 // pred_fallthru
          _
      $region12: #{tpu_custom_call.1} parent=5 // pred_fallthru
        _
      %p327 = scmp.lt.s32.totalorder %s20, 4
      // Predicated region
      $region53: #{tpu_custom_call.1} parent=5 // pred_check
        %p328 = pneg %p327
      $region54: #{tpu_custom_call.1} parent=5 // pred_check_branch
        %330 = sbr.rel (%p328) target = $region56
      $region55: #{tpu_custom_call.1} parent=5 // pred_region
        // Predicated region
        $region57: #{tpu_custom_call.1} parent=55 // pred_check
          %p331 = pneg %p40
        $region58: #{tpu_custom_call.1} parent=55 // pred_check_branch
          %333 = sbr.rel (%p331) target = $region60
        $region59: #{tpu_custom_call.1} parent=55 // pred_region
          %s334 = sand.u32 %s30, 1
          %s335 = scalar_lea.sflag [#allocation3], %s334
          %s336 = sand.u32 %s30, 1
          %s337 = smul.addr %s336, 128
          %s338 = scalar_lea.vmem [#allocation2], %s337
          %s339 = smul.u32 4, %s20
          %s341 = ssub.s32 2048, 2048
          %342 = vsyncadd %s335, %s341
          %s343 = smul.addr %s339, 128
          %s344 = scalar_lea.hbm %s0, %s343
          %s345 = sshll.u32 %s338, 4
          %s346 = int_to_ptr.vmem [resolvable:$true] %s345
          %351 = dma.hbm_to_vmem [thread:$0]  %s344, 2048, %s346, %s335, 2048, 512, 32
        $region60: #{tpu_custom_call.1} parent=55 // pred_fallthru
          _
      $region56: #{tpu_custom_call.1} parent=5 // pred_fallthru
        _
      %p352 = scmp.le.s32.totalorder 1, %s20
      %p353 = scmp.lt.s32.totalorder %s20, 5
      %p354 = pnand %p352, %p353
      %p355 = pneg %p354
      // Predicated region
      $region61: #{tpu_custom_call.1} parent=5 // pred_check
        _
      $region62: #{tpu_custom_call.1} parent=5 // pred_check_branch
        %357 = sbr.rel (%p354) target = $region64
      $region63: #{tpu_custom_call.1} parent=5 // pred_region
        %s358 = ssub.s32 %s20, 1
        %s359 = sand.u32 %s33, 1
        %s360 = scalar_lea.sflag [#allocation3], %s359
        %s361 = sand.u32 %s33, 1
        %s362 = smul.addr %s361, 128
        %s363 = scalar_lea.vmem [#allocation2], %s362
        // Predicated region
        $region65: #{tpu_custom_call.1} parent=63 // pred_check
          %p364 = pneg %p46
        $region66: #{tpu_custom_call.1} parent=63 // pred_check_branch
          %366 = sbr.rel (%p364) target = $region68
        $region67: #{tpu_custom_call.1} parent=63 // pred_region
          %367 = dma.done %s360, 2048
        $region68: #{tpu_custom_call.1} parent=63 // pred_fallthru
          _
        %s368 = sand.u32 %s33, 1
        %s369 = scalar_lea.sflag [#allocation3], %s368
        %s370 = sand.u32 %s33, 1
        %s371 = smul.addr %s370, 128
        %s372 = scalar_lea.vmem [#allocation2], %s371
        %p373 = pneg %p46
        %p374 = pneg %p43
        %p375 = pneg %p67
        %p376 = pneg %p64
        %p377 = pneg %p88
        %p378 = pneg %p85
        %p379 = pneg %p109
        %p380 = pneg %p106
        %p381 = pneg %p130
        %p382 = pneg %p127
        %p383 = pneg %p151
        %p384 = pneg %p148
        %p385 = pneg %p172
        %p386 = pneg %p169
        %p387 = pneg %p193
        %p388 = pneg %p190
        %p389 = pneg %p214
        %p390 = pneg %p211
        %p391 = pneg %p235
        %p392 = pneg %p232
        %p393 = pneg %p256
        %p394 = pneg %p253
        %p395 = pneg %p282
        %p396 = pneg %p279
        %p397 = scmp.lt.s32.totalorder %s25, 3
        %s398 = scalar_select %p397, %s25, 3
        %s399 = smul.addr %s398, 3
        %s400 = smul.addr %s399, 8
        %s401 = scalar_lea.vmem %s11, %s400
        %s402 = smul.u32 4, %s25
        %p403 = scmp.lt.s32.totalorder %s25, 3
        %s404 = scalar_select %p403, %s25, 3
        %s405 = smul.addr %s404, 3
        %s406 = smul.addr %s405, 8
        %s407 = scalar_lea.vmem %s11, %s406
        %v408 = vld [vmem:[%s363] sm:$0xff]
        %v409 = vld [vmem:[%s363 + $0x8] sm:$0xff]
        %v410 = vld [vmem:[%s363 + $0x10] sm:$0xff]
        %v411 = vld [vmem:[%s363 + $0x18] sm:$0xff]
        %v412 = vld [vmem:[%s363 + $0x20] sm:$0xff]
        %v413 = vld [vmem:[%s363 + $0x28] sm:$0xff]
        %v414 = vld [vmem:[%s363 + $0x30] sm:$0xff]
        %v415 = vld [vmem:[%s363 + $0x38] sm:$0xff]
        %v416 = vld [vmem:[%s363 + $0x40] sm:$0xff]
        %v417 = vld [vmem:[%s363 + $0x48] sm:$0xff]
        %v418 = vld [vmem:[%s363 + $0x50] sm:$0xff]
        %v419 = vld [vmem:[%s363 + $0x58] sm:$0xff]
        %v420 = vld [vmem:[%s363 + $0x60] sm:$0xff]
        %v421 = vld [vmem:[%s363 + $0x68] sm:$0xff]
        %v422 = vld [vmem:[%s363 + $0x70] sm:$0xff]
        %v423 = vld [vmem:[%s363 + $0x78] sm:$0xff]
        %v424 = vld [vmem:[%s1] sm:$0xff]
        %v425 = vld [vmem:[%s1 + $0x8] sm:$0xff]
        %v426 = vld [vmem:[%s2] sm:$0xff]
        %v427 = vld [vmem:[%s2 + $0x8] sm:$0xff]
        %429 = vset.pattern.permute.xlu0 0
        %430 = vperm.xlu0 %429, %v426
        %v431 = vpop.permute.xlu0 %430
        %434 = vset.pattern.permute.xlu0 0
        %435 = vperm.xlu0 %434, %v427
        %v436 = vpop.permute.xlu0 %435
        %vm438 = vcmask 261120
        %v440 = vsel %vm438, %v424, 0
        %v443 = vsel %vm438, %v425, 0
        %445 = vmatprep.subr.mxu0 0.0
        %446 = vmatpush1.msra.mxu0 0.0
        %447 = vmatprep.subr.mxu0 0.0
        %448 = vmatpush1.msra.mxu0 0.0
        %449 = vmatprep.subr.mxu0 0.0
        %450 = vmatpush1.msra.mxu0 0.0
        %451 = vmatprep.subr.mxu0 0.0
        %452 = vmatpush1.msra.mxu0 0.0
        %453 = vmatprep.subr.mxu0 0.0
        %454 = vmatpush1.msra.mxu0 0.0
        %455 = vmatprep.subr.mxu0 0.0
        %456 = vmatpush1.msra.mxu0 0.0
        %457 = vmatprep.subr.mxu0 0.0
        %458 = vmatpush1.msra.mxu0 0.0
        %459 = vmatprep.subr.mxu0 0.0
        %460 = vmatpush1.msra.mxu0 0.0
        %461 = vmatprep.subr.mxu0 0.0
        %462 = vmatpush1.msra.mxu0 0.0
        %463 = vmatprep.subr.mxu0 0.0
        %464 = vmatpush1.msra.mxu0 0.0
        %465 = vmatprep.subr.mxu0 0.0
        %466 = vmatpush1.msra.mxu0 0.0
        %467 = vmatprep.subr.mxu0 0.0
        %468 = vmatpush1.msra.mxu0 0.0
        %469 = vmatprep.subr.mxu0 %v421
        %470 = vmatpush1.msra.mxu0 %v420
        %471 = vmatprep.subr.mxu0 %v417
        %472 = vmatpush1.msra.mxu0 %v416
        %473 = vmatprep.subr.mxu0 %v413
        %474 = vmatpush1.msra.mxu0 %v412
        %475 = vmatprep.subr.mxu0 %v409
        %476 = vmatpush1.msra.mxu0 %v408
        %477 = vmatprep.subr.mxu0 0.0
        %478 = vmatpush2.msra.mxu0 0.0
        %479 = vmatprep.subr.mxu0 0.0
        %480 = vmatpush2.msra.mxu0 0.0
        %481 = vmatprep.subr.mxu0 0.0
        %482 = vmatpush2.msra.mxu0 0.0
        %483 = vmatprep.subr.mxu0 0.0
        %484 = vmatpush2.msra.mxu0 0.0
        %485 = vmatprep.subr.mxu0 0.0
        %486 = vmatpush2.msra.mxu0 0.0
        %487 = vmatprep.subr.mxu0 0.0
        %488 = vmatpush2.msra.mxu0 0.0
        %489 = vmatprep.subr.mxu0 0.0
        %490 = vmatpush2.msra.mxu0 0.0
        %491 = vmatprep.subr.mxu0 0.0
        %492 = vmatpush2.msra.mxu0 0.0
        %493 = vmatprep.subr.mxu0 0.0
        %494 = vmatpush2.msra.mxu0 0.0
        %495 = vmatprep.subr.mxu0 0.0
        %496 = vmatpush2.msra.mxu0 0.0
        %497 = vmatprep.subr.mxu0 0.0
        %498 = vmatpush2.msra.mxu0 0.0
        %499 = vmatprep.subr.mxu0 0.0
        %500 = vmatpush2.msra.mxu0 0.0
        %501 = vmatprep.subr.mxu0 0.0
        %502 = vmatpush2.msra.mxu0 0.0
        %503 = vmatprep.subr.mxu0 0.0
        %504 = vmatpush2.msra.mxu0 0.0
        %505 = vmatprep.subr.mxu0 0.0
        %506 = vmatpush2.msra.mxu0 0.0
        %507 = vmatprep.subr.mxu0 0.0
        %508 = vmatpush2.msra.mxu0 0.0
        %509 = vmatprep.mubr.f32.mxu0 0.0
        %510 = vmatmul.mubr.f32.gmra.mxu0 %v440
        %v511 = vpop.f32.mrf.mxu0
        %v512 = vadd.f32 %v431, %v511
        %v513 = vpop.f32.mrf.mxu0
        %v514 = vadd.f32 %v431, %v513
        %515 = vmatprep.mubr.f32.mxu0 0.0
        %516 = vmatmul.mubr.f32.gmra.mxu0 %v443
        %v517 = vpop.f32.mrf.mxu0
        %v518 = vadd.f32 %v436, %v517
        %v519 = vpop.f32.mrf.mxu0
        %v520 = vadd.f32 %v436, %v519
        %521 = vdwg.mxu0
        %522 = vmatprep.subr.mxu0 0.0
        %523 = vmatpush1.msra.mxu0 0.0
        %524 = vmatprep.subr.mxu0 0.0
        %525 = vmatpush1.msra.mxu0 0.0
        %526 = vmatprep.subr.mxu0 0.0
        %527 = vmatpush1.msra.mxu0 0.0
        %528 = vmatprep.subr.mxu0 0.0
        %529 = vmatpush1.msra.mxu0 0.0
        %530 = vmatprep.subr.mxu0 0.0
        %531 = vmatpush1.msra.mxu0 0.0
        %532 = vmatprep.subr.mxu0 0.0
        %533 = vmatpush1.msra.mxu0 0.0
        %534 = vmatprep.subr.mxu0 0.0
        %535 = vmatpush1.msra.mxu0 0.0
        %536 = vmatprep.subr.mxu0 0.0
        %537 = vmatpush1.msra.mxu0 0.0
        %538 = vmatprep.subr.mxu0 0.0
        %539 = vmatpush1.msra.mxu0 0.0
        %540 = vmatprep.subr.mxu0 0.0
        %541 = vmatpush1.msra.mxu0 0.0
        %542 = vmatprep.subr.mxu0 0.0
        %543 = vmatpush1.msra.mxu0 0.0
        %544 = vmatprep.subr.mxu0 0.0
        %545 = vmatpush1.msra.mxu0 0.0
        %546 = vmatprep.subr.mxu0 %v423
        %547 = vmatpush1.msra.mxu0 %v422
        %548 = vmatprep.subr.mxu0 %v419
        %549 = vmatpush1.msra.mxu0 %v418
        %550 = vmatprep.subr.mxu0 %v415
        %551 = vmatpush1.msra.mxu0 %v414
        %552 = vmatprep.subr.mxu0 %v411
        %553 = vmatpush1.msra.mxu0 %v410
        %554 = vmatprep.subr.mxu0 0.0
        %555 = vmatpush2.msra.mxu0 0.0
        %556 = vmatprep.subr.mxu0 0.0
        %557 = vmatpush2.msra.mxu0 0.0
        %558 = vmatprep.subr.mxu0 0.0
        %559 = vmatpush2.msra.mxu0 0.0
        %560 = vmatprep.subr.mxu0 0.0
        %561 = vmatpush2.msra.mxu0 0.0
        %562 = vmatprep.subr.mxu0 0.0
        %563 = vmatpush2.msra.mxu0 0.0
        %564 = vmatprep.subr.mxu0 0.0
        %565 = vmatpush2.msra.mxu0 0.0
        %566 = vmatprep.subr.mxu0 0.0
        %567 = vmatpush2.msra.mxu0 0.0
        %568 = vmatprep.subr.mxu0 0.0
        %569 = vmatpush2.msra.mxu0 0.0
        %570 = vmatprep.subr.mxu0 0.0
        %571 = vmatpush2.msra.mxu0 0.0
        %572 = vmatprep.subr.mxu0 0.0
        %573 = vmatpush2.msra.mxu0 0.0
        %574 = vmatprep.subr.mxu0 0.0
        %575 = vmatpush2.msra.mxu0 0.0
        %576 = vmatprep.subr.mxu0 0.0
        %577 = vmatpush2.msra.mxu0 0.0
        %578 = vmatprep.subr.mxu0 0.0
        %579 = vmatpush2.msra.mxu0 0.0
        %580 = vmatprep.subr.mxu0 0.0
        %581 = vmatpush2.msra.mxu0 0.0
        %582 = vmatprep.subr.mxu0 0.0
        %583 = vmatpush2.msra.mxu0 0.0
        %584 = vmatprep.subr.mxu0 0.0
        %585 = vmatpush2.msra.mxu0 0.0
        %586 = vmatprep.mubr.f32.mxu0 0.0
        %587 = vmatmul.mubr.f32.gmra.mxu0 %v440
        %v588 = vpop.f32.mrf.mxu0
        %v589 = vadd.f32 %v431, %v588
        %v590 = vpop.f32.mrf.mxu0
        %v591 = vadd.f32 %v431, %v590
        %592 = vmatprep.mubr.f32.mxu0 0.0
        %593 = vmatmul.mubr.f32.gmra.mxu0 %v443
        %v594 = vpop.f32.mrf.mxu0
        %v595 = vadd.f32 %v436, %v594
        %v596 = vpop.f32.mrf.mxu0
        %v597 = vadd.f32 %v436, %v596
        %598 = vdwg.mxu0
        %v599 = vmax.f32 %v512, 0.0
        %v600 = vmax.f32 %v514, 0.0
        %v601 = vmax.f32 %v589, 0.0
        %v602 = vmax.f32 %v591, 0.0
        %v603 = vmax.f32 %v518, 0.0
        %v604 = vmax.f32 %v520, 0.0
        %v605 = vmax.f32 %v595, 0.0
        %v606 = vmax.f32 %v597, 0.0
        %v607 = vld [vmem:[%s3] sm:$0xff]
        %v608 = vld [vmem:[%s3 + $0x8] sm:$0xff]
        %v609 = vld [vmem:[%s4] sm:$0xff]
        %v610 = vld [vmem:[%s4 + $0x8] sm:$0xff]
        %612 = vset.pattern.permute.xlu0 0
        %613 = vperm.xlu0 %612, %v609
        %v614 = vpop.permute.xlu0 %613
        %617 = vset.pattern.permute.xlu0 0
        %618 = vperm.xlu0 %617, %v610
        %v619 = vpop.permute.xlu0 %618
        %vm621 = vcmask 130048
        %v623 = vsel %vm621, %v607, 0
        %v626 = vsel %vm621, %v608, 0
        %628 = vmatprep.subr.mxu0 0.0
        %629 = vmatpush1.msra.mxu0 0.0
        %630 = vmatprep.subr.mxu0 0.0
        %631 = vmatpush1.msra.mxu0 0.0
        %632 = vmatprep.subr.mxu0 0.0
        %633 = vmatpush1.msra.mxu0 0.0
        %634 = vmatprep.subr.mxu0 0.0
        %635 = vmatpush1.msra.mxu0 0.0
        %636 = vmatprep.subr.mxu0 0.0
        %637 = vmatpush1.msra.mxu0 0.0
        %638 = vmatprep.subr.mxu0 0.0
        %639 = vmatpush1.msra.mxu0 0.0
        %640 = vmatprep.subr.mxu0 0.0
        %641 = vmatpush1.msra.mxu0 0.0
        %642 = vmatprep.subr.mxu0 0.0
        %643 = vmatpush1.msra.mxu0 0.0
        %644 = vmatprep.subr.mxu0 0.0
        %645 = vmatpush1.msra.mxu0 0.0
        %646 = vmatprep.subr.mxu0 0.0
        %647 = vmatpush1.msra.mxu0 0.0
        %648 = vmatprep.subr.mxu0 0.0
        %649 = vmatpush1.msra.mxu0 0.0
        %650 = vmatprep.subr.mxu0 0.0
        %651 = vmatpush1.msra.mxu0 0.0
        %652 = vmatprep.subr.mxu0 0.0
        %653 = vmatpush1.msra.mxu0 0.0
        %654 = vmatprep.subr.mxu0 0.0
        %655 = vmatpush1.msra.mxu0 0.0
        %656 = vmatprep.subr.mxu0 %v604
        %657 = vmatpush1.msra.mxu0 %v603
        %658 = vmatprep.subr.mxu0 %v600
        %659 = vmatpush1.msra.mxu0 %v599
        %660 = vmatprep.subr.mxu0 0.0
        %661 = vmatpush2.msra.mxu0 0.0
        %662 = vmatprep.subr.mxu0 0.0
        %663 = vmatpush2.msra.mxu0 0.0
        %664 = vmatprep.subr.mxu0 0.0
        %665 = vmatpush2.msra.mxu0 0.0
        %666 = vmatprep.subr.mxu0 0.0
        %667 = vmatpush2.msra.mxu0 0.0
        %668 = vmatprep.subr.mxu0 0.0
        %669 = vmatpush2.msra.mxu0 0.0
        %670 = vmatprep.subr.mxu0 0.0
        %671 = vmatpush2.msra.mxu0 0.0
        %672 = vmatprep.subr.mxu0 0.0
        %673 = vmatpush2.msra.mxu0 0.0
        %674 = vmatprep.subr.mxu0 0.0
        %675 = vmatpush2.msra.mxu0 0.0
        %676 = vmatprep.subr.mxu0 0.0
        %677 = vmatpush2.msra.mxu0 0.0
        %678 = vmatprep.subr.mxu0 0.0
        %679 = vmatpush2.msra.mxu0 0.0
        %680 = vmatprep.subr.mxu0 0.0
        %681 = vmatpush2.msra.mxu0 0.0
        %682 = vmatprep.subr.mxu0 0.0
        %683 = vmatpush2.msra.mxu0 0.0
        %684 = vmatprep.subr.mxu0 0.0
        %685 = vmatpush2.msra.mxu0 0.0
        %686 = vmatprep.subr.mxu0 0.0
        %687 = vmatpush2.msra.mxu0 0.0
        %688 = vmatprep.subr.mxu0 0.0
        %689 = vmatpush2.msra.mxu0 0.0
        %690 = vmatprep.subr.mxu0 0.0
        %691 = vmatpush2.msra.mxu0 0.0
        %692 = vmatprep.mubr.f32.mxu0 0.0
        %693 = vmatmul.mubr.f32.gmra.mxu0 %v623
        %v694 = vpop.f32.mrf.mxu0
        %v695 = vadd.f32 %v614, %v694
        %v696 = vpop.f32.mrf.mxu0
        %v697 = vadd.f32 %v614, %v696
        %698 = vmatprep.mubr.f32.mxu0 0.0
        %699 = vmatmul.mubr.f32.gmra.mxu0 %v626
        %v700 = vpop.f32.mrf.mxu0
        %v701 = vadd.f32 %v619, %v700
        %v702 = vpop.f32.mrf.mxu0
        %v703 = vadd.f32 %v619, %v702
        %704 = vdwg.mxu0
        %705 = vmatprep.subr.mxu0 0.0
        %706 = vmatpush1.msra.mxu0 0.0
        %707 = vmatprep.subr.mxu0 0.0
        %708 = vmatpush1.msra.mxu0 0.0
        %709 = vmatprep.subr.mxu0 0.0
        %710 = vmatpush1.msra.mxu0 0.0
        %711 = vmatprep.subr.mxu0 0.0
        %712 = vmatpush1.msra.mxu0 0.0
        %713 = vmatprep.subr.mxu0 0.0
        %714 = vmatpush1.msra.mxu0 0.0
        %715 = vmatprep.subr.mxu0 0.0
        %716 = vmatpush1.msra.mxu0 0.0
        %717 = vmatprep.subr.mxu0 0.0
        %718 = vmatpush1.msra.mxu0 0.0
        %719 = vmatprep.subr.mxu0 0.0
        %720 = vmatpush1.msra.mxu0 0.0
        %721 = vmatprep.subr.mxu0 0.0
        %722 = vmatpush1.msra.mxu0 0.0
        %723 = vmatprep.subr.mxu0 0.0
        %724 = vmatpush1.msra.mxu0 0.0
        %725 = vmatprep.subr.mxu0 0.0
        %726 = vmatpush1.msra.mxu0 0.0
        %727 = vmatprep.subr.mxu0 0.0
        %728 = vmatpush1.msra.mxu0 0.0
        %729 = vmatprep.subr.mxu0 0.0
        %730 = vmatpush1.msra.mxu0 0.0
        %731 = vmatprep.subr.mxu0 0.0
        %732 = vmatpush1.msra.mxu0 0.0
        %733 = vmatprep.subr.mxu0 %v606
        %734 = vmatpush1.msra.mxu0 %v605
        %735 = vmatprep.subr.mxu0 %v602
        %736 = vmatpush1.msra.mxu0 %v601
        %737 = vmatprep.subr.mxu0 0.0
        %738 = vmatpush2.msra.mxu0 0.0
        %739 = vmatprep.subr.mxu0 0.0
        %740 = vmatpush2.msra.mxu0 0.0
        %741 = vmatprep.subr.mxu0 0.0
        %742 = vmatpush2.msra.mxu0 0.0
        %743 = vmatprep.subr.mxu0 0.0
        %744 = vmatpush2.msra.mxu0 0.0
        %745 = vmatprep.subr.mxu0 0.0
        %746 = vmatpush2.msra.mxu0 0.0
        %747 = vmatprep.subr.mxu0 0.0
        %748 = vmatpush2.msra.mxu0 0.0
        %749 = vmatprep.subr.mxu0 0.0
        %750 = vmatpush2.msra.mxu0 0.0
        %751 = vmatprep.subr.mxu0 0.0
        %752 = vmatpush2.msra.mxu0 0.0
        %753 = vmatprep.subr.mxu0 0.0
        %754 = vmatpush2.msra.mxu0 0.0
        %755 = vmatprep.subr.mxu0 0.0
        %756 = vmatpush2.msra.mxu0 0.0
        %757 = vmatprep.subr.mxu0 0.0
        %758 = vmatpush2.msra.mxu0 0.0
        %759 = vmatprep.subr.mxu0 0.0
        %760 = vmatpush2.msra.mxu0 0.0
        %761 = vmatprep.subr.mxu0 0.0
        %762 = vmatpush2.msra.mxu0 0.0
        %763 = vmatprep.subr.mxu0 0.0
        %764 = vmatpush2.msra.mxu0 0.0
        %765 = vmatprep.subr.mxu0 0.0
        %766 = vmatpush2.msra.mxu0 0.0
        %767 = vmatprep.subr.mxu0 0.0
        %768 = vmatpush2.msra.mxu0 0.0
        %769 = vmatprep.mubr.f32.mxu0 0.0
        %770 = vmatmul.mubr.f32.gmra.mxu0 %v623
        %v771 = vpop.f32.mrf.mxu0
        %v772 = vadd.f32 %v614, %v771
        %v773 = vpop.f32.mrf.mxu0
        %v774 = vadd.f32 %v614, %v773
        %775 = vmatprep.mubr.f32.mxu0 0.0
        %776 = vmatmul.mubr.f32.gmra.mxu0 %v626
        %v777 = vpop.f32.mrf.mxu0
        %v778 = vadd.f32 %v619, %v777
        %v779 = vpop.f32.mrf.mxu0
        %v780 = vadd.f32 %v619, %v779
        %781 = vdwg.mxu0
        %v782 = vmax.f32 %v695, 0.0
        %v783 = vmax.f32 %v697, 0.0
        %v784 = vmax.f32 %v772, 0.0
        %v785 = vmax.f32 %v774, 0.0
        %v786 = vmax.f32 %v701, 0.0
        %v787 = vmax.f32 %v703, 0.0
        %v788 = vmax.f32 %v778, 0.0
        %v789 = vmax.f32 %v780, 0.0
        %v790 = vld [vmem:[%s5] sm:$0xff]
        %v791 = vld [vmem:[%s6] sm:$0xff]
        %793 = vset.pattern.permute.xlu0 0
        %794 = vperm.xlu0 %793, %v791
        %v795 = vpop.permute.xlu0 %794
        %v798 = vsel %vm621, %v790, 0
        %800 = vmatprep.subr.mxu0 0.0
        %801 = vmatpush1.msra.mxu0 0.0
        %802 = vmatprep.subr.mxu0 0.0
        %803 = vmatpush1.msra.mxu0 0.0
        %804 = vmatprep.subr.mxu0 0.0
        %805 = vmatpush1.msra.mxu0 0.0
        %806 = vmatprep.subr.mxu0 0.0
        %807 = vmatpush1.msra.mxu0 0.0
        %808 = vmatprep.subr.mxu0 0.0
        %809 = vmatpush1.msra.mxu0 0.0
        %810 = vmatprep.subr.mxu0 0.0
        %811 = vmatpush1.msra.mxu0 0.0
        %812 = vmatprep.subr.mxu0 0.0
        %813 = vmatpush1.msra.mxu0 0.0
        %814 = vmatprep.subr.mxu0 0.0
        %815 = vmatpush1.msra.mxu0 0.0
        %816 = vmatprep.subr.mxu0 0.0
        %817 = vmatpush1.msra.mxu0 0.0
        %818 = vmatprep.subr.mxu0 0.0
        %819 = vmatpush1.msra.mxu0 0.0
        %820 = vmatprep.subr.mxu0 0.0
        %821 = vmatpush1.msra.mxu0 0.0
        %822 = vmatprep.subr.mxu0 0.0
        %823 = vmatpush1.msra.mxu0 0.0
        %824 = vmatprep.subr.mxu0 0.0
        %825 = vmatpush1.msra.mxu0 0.0
        %826 = vmatprep.subr.mxu0 0.0
        %827 = vmatpush1.msra.mxu0 0.0
        %828 = vmatprep.subr.mxu0 %v787
        %829 = vmatpush1.msra.mxu0 %v786
        %830 = vmatprep.subr.mxu0 %v783
        %831 = vmatpush1.msra.mxu0 %v782
        %832 = vmatprep.subr.mxu0 0.0
        %833 = vmatpush2.msra.mxu0 0.0
        %834 = vmatprep.subr.mxu0 0.0
        %835 = vmatpush2.msra.mxu0 0.0
        %836 = vmatprep.subr.mxu0 0.0
        %837 = vmatpush2.msra.mxu0 0.0
        %838 = vmatprep.subr.mxu0 0.0
        %839 = vmatpush2.msra.mxu0 0.0
        %840 = vmatprep.subr.mxu0 0.0
        %841 = vmatpush2.msra.mxu0 0.0
        %842 = vmatprep.subr.mxu0 0.0
        %843 = vmatpush2.msra.mxu0 0.0
        %844 = vmatprep.subr.mxu0 0.0
        %845 = vmatpush2.msra.mxu0 0.0
        %846 = vmatprep.subr.mxu0 0.0
        %847 = vmatpush2.msra.mxu0 0.0
        %848 = vmatprep.subr.mxu0 0.0
        %849 = vmatpush2.msra.mxu0 0.0
        %850 = vmatprep.subr.mxu0 0.0
        %851 = vmatpush2.msra.mxu0 0.0
        %852 = vmatprep.subr.mxu0 0.0
        %853 = vmatpush2.msra.mxu0 0.0
        %854 = vmatprep.subr.mxu0 0.0
        %855 = vmatpush2.msra.mxu0 0.0
        %856 = vmatprep.subr.mxu0 0.0
        %857 = vmatpush2.msra.mxu0 0.0
        %858 = vmatprep.subr.mxu0 0.0
        %859 = vmatpush2.msra.mxu0 0.0
        %860 = vmatprep.subr.mxu0 0.0
        %861 = vmatpush2.msra.mxu0 0.0
        %862 = vmatprep.subr.mxu0 0.0
        %863 = vmatpush2.msra.mxu0 0.0
        %864 = vmatprep.mubr.f32.mxu0 0.0
        %865 = vmatmul.mubr.f32.gmra.mxu0 %v798
        %v866 = vpop.f32.mrf.mxu0
        %v867 = vadd.f32 %v795, %v866
        %v868 = vpop.f32.mrf.mxu0
        %v869 = vadd.f32 %v795, %v868
        %870 = vdwg.mxu0
        %871 = vmatprep.subr.mxu0 0.0
        %872 = vmatpush1.msra.mxu0 0.0
        %873 = vmatprep.subr.mxu0 0.0
        %874 = vmatpush1.msra.mxu0 0.0
        %875 = vmatprep.subr.mxu0 0.0
        %876 = vmatpush1.msra.mxu0 0.0
        %877 = vmatprep.subr.mxu0 0.0
        %878 = vmatpush1.msra.mxu0 0.0
        %879 = vmatprep.subr.mxu0 0.0
        %880 = vmatpush1.msra.mxu0 0.0
        %881 = vmatprep.subr.mxu0 0.0
        %882 = vmatpush1.msra.mxu0 0.0
        %883 = vmatprep.subr.mxu0 0.0
        %884 = vmatpush1.msra.mxu0 0.0
        %885 = vmatprep.subr.mxu0 0.0
        %886 = vmatpush1.msra.mxu0 0.0
        %887 = vmatprep.subr.mxu0 0.0
        %888 = vmatpush1.msra.mxu0 0.0
        %889 = vmatprep.subr.mxu0 0.0
        %890 = vmatpush1.msra.mxu0 0.0
        %891 = vmatprep.subr.mxu0 0.0
        %892 = vmatpush1.msra.mxu0 0.0
        %893 = vmatprep.subr.mxu0 0.0
        %894 = vmatpush1.msra.mxu0 0.0
        %895 = vmatprep.subr.mxu0 0.0
        %896 = vmatpush1.msra.mxu0 0.0
        %897 = vmatprep.subr.mxu0 0.0
        %898 = vmatpush1.msra.mxu0 0.0
        %899 = vmatprep.subr.mxu0 %v789
        %900 = vmatpush1.msra.mxu0 %v788
        %901 = vmatprep.subr.mxu0 %v785
        %902 = vmatpush1.msra.mxu0 %v784
        %903 = vmatprep.subr.mxu0 0.0
        %904 = vmatpush2.msra.mxu0 0.0
        %905 = vmatprep.subr.mxu0 0.0
        %906 = vmatpush2.msra.mxu0 0.0
        %907 = vmatprep.subr.mxu0 0.0
        %908 = vmatpush2.msra.mxu0 0.0
        %909 = vmatprep.subr.mxu0 0.0
        %910 = vmatpush2.msra.mxu0 0.0
        %911 = vmatprep.subr.mxu0 0.0
        %912 = vmatpush2.msra.mxu0 0.0
        %913 = vmatprep.subr.mxu0 0.0
        %914 = vmatpush2.msra.mxu0 0.0
        %915 = vmatprep.subr.mxu0 0.0
        %916 = vmatpush2.msra.mxu0 0.0
        %917 = vmatprep.subr.mxu0 0.0
        %918 = vmatpush2.msra.mxu0 0.0
        %919 = vmatprep.subr.mxu0 0.0
        %920 = vmatpush2.msra.mxu0 0.0
        %921 = vmatprep.subr.mxu0 0.0
        %922 = vmatpush2.msra.mxu0 0.0
        %923 = vmatprep.subr.mxu0 0.0
        %924 = vmatpush2.msra.mxu0 0.0
        %925 = vmatprep.subr.mxu0 0.0
        %926 = vmatpush2.msra.mxu0 0.0
        %927 = vmatprep.subr.mxu0 0.0
        %928 = vmatpush2.msra.mxu0 0.0
        %929 = vmatprep.subr.mxu0 0.0
        %930 = vmatpush2.msra.mxu0 0.0
        %931 = vmatprep.subr.mxu0 0.0
        %932 = vmatpush2.msra.mxu0 0.0
        %933 = vmatprep.subr.mxu0 0.0
        %934 = vmatpush2.msra.mxu0 0.0
        %935 = vmatprep.mubr.f32.mxu0 0.0
        %936 = vmatmul.mubr.f32.gmra.mxu0 %v798
        %v937 = vpop.f32.mrf.mxu0
        %v938 = vadd.f32 %v795, %v937
        %v939 = vpop.f32.mrf.mxu0
        %v940 = vadd.f32 %v795, %v939
        %941 = vdwg.mxu0
        %v942 = vmax.f32 %v867, 0.0
        %v943 = vmax.f32 %v869, 0.0
        %v944 = vmax.f32 %v938, 0.0
        %v945 = vmax.f32 %v940, 0.0
        %v946 = vld [vmem:[%s7] sm:$0xff]
        %v947 = vld [vmem:[%s8] sm:$0xff]
        %949 = vset.pattern.permute.xlu0 0
        %950 = vperm.xlu0 %949, %v947
        %v951 = vpop.permute.xlu0 %950
        %vm953 = vcmask 64512
        %v955 = vsel %vm953, %v946, 0
        %957 = vmatprep.subr.mxu0 0.0
        %958 = vmatpush1.msra.mxu0 0.0
        %959 = vmatprep.subr.mxu0 0.0
        %960 = vmatpush1.msra.mxu0 0.0
        %961 = vmatprep.subr.mxu0 0.0
        %962 = vmatpush1.msra.mxu0 0.0
        %963 = vmatprep.subr.mxu0 0.0
        %964 = vmatpush1.msra.mxu0 0.0
        %965 = vmatprep.subr.mxu0 0.0
        %966 = vmatpush1.msra.mxu0 0.0
        %967 = vmatprep.subr.mxu0 0.0
        %968 = vmatpush1.msra.mxu0 0.0
        %969 = vmatprep.subr.mxu0 0.0
        %970 = vmatpush1.msra.mxu0 0.0
        %971 = vmatprep.subr.mxu0 0.0
        %972 = vmatpush1.msra.mxu0 0.0
        %973 = vmatprep.subr.mxu0 0.0
        %974 = vmatpush1.msra.mxu0 0.0
        %975 = vmatprep.subr.mxu0 0.0
        %976 = vmatpush1.msra.mxu0 0.0
        %977 = vmatprep.subr.mxu0 0.0
        %978 = vmatpush1.msra.mxu0 0.0
        %979 = vmatprep.subr.mxu0 0.0
        %980 = vmatpush1.msra.mxu0 0.0
        %981 = vmatprep.subr.mxu0 0.0
        %982 = vmatpush1.msra.mxu0 0.0
        %983 = vmatprep.subr.mxu0 0.0
        %984 = vmatpush1.msra.mxu0 0.0
        %985 = vmatprep.subr.mxu0 0.0
        %986 = vmatpush1.msra.mxu0 0.0
        %987 = vmatprep.subr.mxu0 %v943
        %988 = vmatpush1.msra.mxu0 %v942
        %989 = vmatprep.subr.mxu0 0.0
        %990 = vmatpush2.msra.mxu0 0.0
        %991 = vmatprep.subr.mxu0 0.0
        %992 = vmatpush2.msra.mxu0 0.0
        %993 = vmatprep.subr.mxu0 0.0
        %994 = vmatpush2.msra.mxu0 0.0
        %995 = vmatprep.subr.mxu0 0.0
        %996 = vmatpush2.msra.mxu0 0.0
        %997 = vmatprep.subr.mxu0 0.0
        %998 = vmatpush2.msra.mxu0 0.0
        %999 = vmatprep.subr.mxu0 0.0
        %1000 = vmatpush2.msra.mxu0 0.0
        %1001 = vmatprep.subr.mxu0 0.0
        %1002 = vmatpush2.msra.mxu0 0.0
        %1003 = vmatprep.subr.mxu0 0.0
        %1004 = vmatpush2.msra.mxu0 0.0
        %1005 = vmatprep.subr.mxu0 0.0
        %1006 = vmatpush2.msra.mxu0 0.0
        %1007 = vmatprep.subr.mxu0 0.0
        %1008 = vmatpush2.msra.mxu0 0.0
        %1009 = vmatprep.subr.mxu0 0.0
        %1010 = vmatpush2.msra.mxu0 0.0
        %1011 = vmatprep.subr.mxu0 0.0
        %1012 = vmatpush2.msra.mxu0 0.0
        %1013 = vmatprep.subr.mxu0 0.0
        %1014 = vmatpush2.msra.mxu0 0.0
        %1015 = vmatprep.subr.mxu0 0.0
        %1016 = vmatpush2.msra.mxu0 0.0
        %1017 = vmatprep.subr.mxu0 0.0
        %1018 = vmatpush2.msra.mxu0 0.0
        %1019 = vmatprep.subr.mxu0 0.0
        %1020 = vmatpush2.msra.mxu0 0.0
        %1021 = vmatprep.mubr.f32.mxu0 0.0
        %1022 = vmatmul.mubr.f32.gmra.mxu0 %v955
        %v1023 = vpop.f32.mrf.mxu0
        %v1024 = vadd.f32 %v951, %v1023
        %v1025 = vpop.f32.mrf.mxu0
        %v1026 = vadd.f32 %v951, %v1025
        %1027 = vdwg.mxu0
        %1028 = vmatprep.subr.mxu0 0.0
        %1029 = vmatpush1.msra.mxu0 0.0
        %1030 = vmatprep.subr.mxu0 0.0
        %1031 = vmatpush1.msra.mxu0 0.0
        %1032 = vmatprep.subr.mxu0 0.0
        %1033 = vmatpush1.msra.mxu0 0.0
        %1034 = vmatprep.subr.mxu0 0.0
        %1035 = vmatpush1.msra.mxu0 0.0
        %1036 = vmatprep.subr.mxu0 0.0
        %1037 = vmatpush1.msra.mxu0 0.0
        %1038 = vmatprep.subr.mxu0 0.0
        %1039 = vmatpush1.msra.mxu0 0.0
        %1040 = vmatprep.subr.mxu0 0.0
        %1041 = vmatpush1.msra.mxu0 0.0
        %1042 = vmatprep.subr.mxu0 0.0
        %1043 = vmatpush1.msra.mxu0 0.0
        %1044 = vmatprep.subr.mxu0 0.0
        %1045 = vmatpush1.msra.mxu0 0.0
        %1046 = vmatprep.subr.mxu0 0.0
        %1047 = vmatpush1.msra.mxu0 0.0
        %1048 = vmatprep.subr.mxu0 0.0
        %1049 = vmatpush1.msra.mxu0 0.0
        %1050 = vmatprep.subr.mxu0 0.0
        %1051 = vmatpush1.msra.mxu0 0.0
        %1052 = vmatprep.subr.mxu0 0.0
        %1053 = vmatpush1.msra.mxu0 0.0
        %1054 = vmatprep.subr.mxu0 0.0
        %1055 = vmatpush1.msra.mxu0 0.0
        %1056 = vmatprep.subr.mxu0 0.0
        %1057 = vmatpush1.msra.mxu0 0.0
        %1058 = vmatprep.subr.mxu0 %v945
        %1059 = vmatpush1.msra.mxu0 %v944
        %1060 = vmatprep.subr.mxu0 0.0
        %1061 = vmatpush2.msra.mxu0 0.0
        %1062 = vmatprep.subr.mxu0 0.0
        %1063 = vmatpush2.msra.mxu0 0.0
        %1064 = vmatprep.subr.mxu0 0.0
        %1065 = vmatpush2.msra.mxu0 0.0
        %1066 = vmatprep.subr.mxu0 0.0
        %1067 = vmatpush2.msra.mxu0 0.0
        %1068 = vmatprep.subr.mxu0 0.0
        %1069 = vmatpush2.msra.mxu0 0.0
        %1070 = vmatprep.subr.mxu0 0.0
        %1071 = vmatpush2.msra.mxu0 0.0
        %1072 = vmatprep.subr.mxu0 0.0
        %1073 = vmatpush2.msra.mxu0 0.0
        %1074 = vmatprep.subr.mxu0 0.0
        %1075 = vmatpush2.msra.mxu0 0.0
        %1076 = vmatprep.subr.mxu0 0.0
        %1077 = vmatpush2.msra.mxu0 0.0
        %1078 = vmatprep.subr.mxu0 0.0
        %1079 = vmatpush2.msra.mxu0 0.0
        %1080 = vmatprep.subr.mxu0 0.0
        %1081 = vmatpush2.msra.mxu0 0.0
        %1082 = vmatprep.subr.mxu0 0.0
        %1083 = vmatpush2.msra.mxu0 0.0
        %1084 = vmatprep.subr.mxu0 0.0
        %1085 = vmatpush2.msra.mxu0 0.0
        %1086 = vmatprep.subr.mxu0 0.0
        %1087 = vmatpush2.msra.mxu0 0.0
        %1088 = vmatprep.subr.mxu0 0.0
        %1089 = vmatpush2.msra.mxu0 0.0
        %1090 = vmatprep.subr.mxu0 0.0
        %1091 = vmatpush2.msra.mxu0 0.0
        %1092 = vmatprep.mubr.f32.mxu0 0.0
        %1093 = vmatmul.mubr.f32.gmra.mxu0 %v955
        %v1094 = vpop.f32.mrf.mxu0
        %v1095 = vadd.f32 %v951, %v1094
        %v1096 = vpop.f32.mrf.mxu0
        %v1097 = vadd.f32 %v951, %v1096
        %1098 = vdwg.mxu0
        %v1099 = vxor.u32 %v1024, 2147483648
        %v1100 = vxor.u32 %v1026, 2147483648
        %v1101 = vxor.u32 %v1095, 2147483648
        %v1102 = vxor.u32 %v1097, 2147483648
        %v1103 = vmul.f32 %v1099, 1.442695
        %v1104 = vpow.pop %v1103
        %v1105 = vmul.f32 %v1100, 1.442695
        %v1106 = vpow.pop %v1105
        %v1107 = vmul.f32 %v1101, 1.442695
        %v1108 = vpow.pop %v1107
        %v1109 = vmul.f32 %v1102, 1.442695
        %v1110 = vpow.pop %v1109
        %v1111 = vadd.f32 %v1104, 1.0
        %v1112 = vadd.f32 %v1106, 1.0
        %v1113 = vadd.f32 %v1108, 1.0
        %v1114 = vadd.f32 %v1110, 1.0
        %v1115 = vrcp.pop %v1111
        %v1116 = vmul.f32 1.0, %v1115
        %v1117 = vrcp.pop %v1112
        %v1118 = vmul.f32 1.0, %v1117
        %v1119 = vrcp.pop %v1113
        %v1120 = vmul.f32 1.0, %v1119
        %v1121 = vrcp.pop %v1114
        %v1122 = vmul.f32 1.0, %v1121
        %v1123 = vld [vmem:[%s9] sm:$0xff]
        %v1124 = vld [vmem:[%s9 + $0x8] sm:$0xff]
        %v1125 = vld [vmem:[%s9 + $0x10] sm:$0xff]
        %v1126 = vld [vmem:[%s10] sm:$0xff]
        %v1127 = vld [vmem:[%s10 + $0x8] sm:$0xff]
        %v1128 = vld [vmem:[%s10 + $0x10] sm:$0xff]
        %v1129 = vmul.f32 %v1116, %v1116
        %v1130 = vmul.f32 %v1118, %v1118
        %v1131 = vmul.f32 %v1120, %v1120
        %v1132 = vmul.f32 %v1122, %v1122
        %v1133 = vrot.slane %v1129, 4
        %v1134 = vadd.f32 %v1129, %v1133
        %v1135 = vrot.slane %v1134, 2
        %v1136 = vadd.f32 %v1134, %v1135
        %v1137 = vrot.slane %v1136, 1
        %v1138 = vadd.f32 %v1136, %v1137
        %v1139 = vrot.slane %v1130, 4
        %v1140 = vadd.f32 %v1130, %v1139
        %v1141 = vrot.slane %v1140, 2
        %v1142 = vadd.f32 %v1140, %v1141
        %v1143 = vrot.slane %v1142, 1
        %v1144 = vadd.f32 %v1142, %v1143
        %v1145 = vrot.slane %v1131, 4
        %v1146 = vadd.f32 %v1131, %v1145
        %v1147 = vrot.slane %v1146, 2
        %v1148 = vadd.f32 %v1146, %v1147
        %v1149 = vrot.slane %v1148, 1
        %v1150 = vadd.f32 %v1148, %v1149
        %v1151 = vrot.slane %v1132, 4
        %v1152 = vadd.f32 %v1132, %v1151
        %v1153 = vrot.slane %v1152, 2
        %v1154 = vadd.f32 %v1152, %v1153
        %v1155 = vrot.slane %v1154, 1
        %v1156 = vadd.f32 %v1154, %v1155
        %v1158 = vsel %vm953, %v1123, 0
        %v1161 = vsel %vm953, %v1124, 0
        %v1164 = vsel %vm953, %v1125, 0
        %1166 = vmatprep.subr.mxu0 0.0
        %1167 = vmatpush1.msra.mxu0 0.0
        %1168 = vmatprep.subr.mxu0 0.0
        %1169 = vmatpush1.msra.mxu0 0.0
        %1170 = vmatprep.subr.mxu0 0.0
        %1171 = vmatpush1.msra.mxu0 0.0
        %1172 = vmatprep.subr.mxu0 0.0
        %1173 = vmatpush1.msra.mxu0 0.0
        %1174 = vmatprep.subr.mxu0 0.0
        %1175 = vmatpush1.msra.mxu0 0.0
        %1176 = vmatprep.subr.mxu0 0.0
        %1177 = vmatpush1.msra.mxu0 0.0
        %1178 = vmatprep.subr.mxu0 0.0
        %1179 = vmatpush1.msra.mxu0 0.0
        %1180 = vmatprep.subr.mxu0 0.0
        %1181 = vmatpush1.msra.mxu0 0.0
        %1182 = vmatprep.subr.mxu0 0.0
        %1183 = vmatpush1.msra.mxu0 0.0
        %1184 = vmatprep.subr.mxu0 0.0
        %1185 = vmatpush1.msra.mxu0 0.0
        %1186 = vmatprep.subr.mxu0 0.0
        %1187 = vmatpush1.msra.mxu0 0.0
        %1188 = vmatprep.subr.mxu0 0.0
        %1189 = vmatpush1.msra.mxu0 0.0
        %1190 = vmatprep.subr.mxu0 0.0
        %1191 = vmatpush1.msra.mxu0 0.0
        %1192 = vmatprep.subr.mxu0 0.0
        %1193 = vmatpush1.msra.mxu0 0.0
        %1194 = vmatprep.subr.mxu0 0.0
        %1195 = vmatpush1.msra.mxu0 0.0
        %1196 = vmatprep.subr.mxu0 %v1118
        %1197 = vmatpush1.msra.mxu0 %v1116
        %1198 = vmatprep.subr.mxu0 0.0
        %1199 = vmatpush2.msra.mxu0 0.0
        %1200 = vmatprep.subr.mxu0 0.0
        %1201 = vmatpush2.msra.mxu0 0.0
        %1202 = vmatprep.subr.mxu0 0.0
        %1203 = vmatpush2.msra.mxu0 0.0
        %1204 = vmatprep.subr.mxu0 0.0
        %1205 = vmatpush2.msra.mxu0 0.0
        %1206 = vmatprep.subr.mxu0 0.0
        %1207 = vmatpush2.msra.mxu0 0.0
        %1208 = vmatprep.subr.mxu0 0.0
        %1209 = vmatpush2.msra.mxu0 0.0
        %1210 = vmatprep.subr.mxu0 0.0
        %1211 = vmatpush2.msra.mxu0 0.0
        %1212 = vmatprep.subr.mxu0 0.0
        %1213 = vmatpush2.msra.mxu0 0.0
        %1214 = vmatprep.subr.mxu0 0.0
        %1215 = vmatpush2.msra.mxu0 0.0
        %1216 = vmatprep.subr.mxu0 0.0
        %1217 = vmatpush2.msra.mxu0 0.0
        %1218 = vmatprep.subr.mxu0 0.0
        %1219 = vmatpush2.msra.mxu0 0.0
        %1220 = vmatprep.subr.mxu0 0.0
        %1221 = vmatpush2.msra.mxu0 0.0
        %1222 = vmatprep.subr.mxu0 0.0
        %1223 = vmatpush2.msra.mxu0 0.0
        %1224 = vmatprep.subr.mxu0 0.0
        %1225 = vmatpush2.msra.mxu0 0.0
        %1226 = vmatprep.subr.mxu0 0.0
        %1227 = vmatpush2.msra.mxu0 0.0
        %1228 = vmatprep.subr.mxu0 0.0
        %1229 = vmatpush2.msra.mxu0 0.0
        %1230 = vmatprep.mubr.f32.mxu0 0.0
        %1231 = vmatmul.mubr.f32.gmra.mxu0 %v1158
        %v1232 = vpop.f32.mrf.mxu0
        %v1233 = vadd.f32 0.0, %v1232
        %v1234 = vpop.f32.mrf.mxu0
        %v1235 = vadd.f32 0.0, %v1234
        %1236 = vmatprep.mubr.f32.mxu0 0.0
        %1237 = vmatmul.mubr.f32.gmra.mxu0 %v1161
        %v1238 = vpop.f32.mrf.mxu0
        %v1239 = vadd.f32 0.0, %v1238
        %v1240 = vpop.f32.mrf.mxu0
        %v1241 = vadd.f32 0.0, %v1240
        %1242 = vmatprep.mubr.f32.mxu0 0.0
        %1243 = vmatmul.mubr.f32.gmra.mxu0 %v1164
        %v1244 = vpop.f32.mrf.mxu0
        %v1245 = vadd.f32 0.0, %v1244
        %v1246 = vpop.f32.mrf.mxu0
        %v1247 = vadd.f32 0.0, %v1246
        %1248 = vdwg.mxu0
        %v1249 = vmul.f32 %v1233, 2.0
        %v1250 = vmul.f32 %v1235, 2.0
        %v1251 = vmul.f32 %v1239, 2.0
        %v1252 = vmul.f32 %v1241, 2.0
        %v1253 = vmul.f32 %v1245, 2.0
        %v1254 = vmul.f32 %v1247, 2.0
        %v1255 = vsub.f32 %v1138, %v1249
        %v1256 = vsub.f32 %v1144, %v1250
        %v1257 = vsub.f32 %v1138, %v1251
        %v1258 = vsub.f32 %v1144, %v1252
        %v1259 = vsub.f32 %v1138, %v1253
        %v1260 = vsub.f32 %v1144, %v1254
        %1262 = vset.pattern.permute.xlu0 0
        %1263 = vperm.xlu0 %1262, %v1126
        %v1264 = vpop.permute.xlu0 %1263
        %1267 = vset.pattern.permute.xlu0 0
        %1268 = vperm.xlu0 %1267, %v1127
        %v1269 = vpop.permute.xlu0 %1268
        %1272 = vset.pattern.permute.xlu0 0
        %1273 = vperm.xlu0 %1272, %v1128
        %v1274 = vpop.permute.xlu0 %1273
        %v1276 = vadd.f32 %v1255, %v1264
        %v1277 = vadd.f32 %v1256, %v1264
        %v1278 = vadd.f32 %v1257, %v1269
        %v1279 = vadd.f32 %v1258, %v1269
        %v1280 = vadd.f32 %v1259, %v1274
        %v1281 = vadd.f32 %v1260, %v1274
        %v1282 = vmax.f32 %v1276, 0.0
        %v1283 = vmax.f32 %v1277, 0.0
        %v1284 = vmax.f32 %v1278, 0.0
        %v1285 = vmax.f32 %v1279, 0.0
        %v1286 = vmax.f32 %v1280, 0.0
        %v1287 = vmax.f32 %v1281, 0.0
        %v1288 = vmin.f32 %v1282, %v1283
        %1289 = vmin.xlane.f32.xlu0 %v1288
        %v1290 = vpop.xlane.xlu0 %1289
        %v1291 = vmin.f32 %v1284, %v1285
        %1292 = vmin.xlane.f32.xlu0 %v1291
        %v1293 = vpop.xlane.xlu0 %1292
        %v1294 = vmin.f32 %v1286, %v1287
        %1295 = vmin.xlane.f32.xlu0 %v1294
        %v1296 = vpop.xlane.xlu0 %1295
        %vm1297 = vcmask 7168
        %1298 = vst.msk [vmem:[%s407] sm:$0xff] %vm1297, %v1290
        %1299 = vst.msk [vmem:[%s407 + $0x8] sm:$0xff] %vm1297, %v1293
        %1300 = vst.msk [vmem:[%s407 + $0x10] sm:$0xff] %vm1297, %v1296
        %1301 = vmatprep.subr.mxu0 0.0
        %1302 = vmatpush1.msra.mxu0 0.0
        %1303 = vmatprep.subr.mxu0 0.0
        %1304 = vmatpush1.msra.mxu0 0.0
        %1305 = vmatprep.subr.mxu0 0.0
        %1306 = vmatpush1.msra.mxu0 0.0
        %1307 = vmatprep.subr.mxu0 0.0
        %1308 = vmatpush1.msra.mxu0 0.0
        %1309 = vmatprep.subr.mxu0 0.0
        %1310 = vmatpush1.msra.mxu0 0.0
        %1311 = vmatprep.subr.mxu0 0.0
        %1312 = vmatpush1.msra.mxu0 0.0
        %1313 = vmatprep.subr.mxu0 0.0
        %1314 = vmatpush1.msra.mxu0 0.0
        %1315 = vmatprep.subr.mxu0 0.0
        %1316 = vmatpush1.msra.mxu0 0.0
        %1317 = vmatprep.subr.mxu0 0.0
        %1318 = vmatpush1.msra.mxu0 0.0
        %1319 = vmatprep.subr.mxu0 0.0
        %1320 = vmatpush1.msra.mxu0 0.0
        %1321 = vmatprep.subr.mxu0 0.0
        %1322 = vmatpush1.msra.mxu0 0.0
        %1323 = vmatprep.subr.mxu0 0.0
        %1324 = vmatpush1.msra.mxu0 0.0
        %1325 = vmatprep.subr.mxu0 0.0
        %1326 = vmatpush1.msra.mxu0 0.0
        %1327 = vmatprep.subr.mxu0 0.0
        %1328 = vmatpush1.msra.mxu0 0.0
        %1329 = vmatprep.subr.mxu0 0.0
        %1330 = vmatpush1.msra.mxu0 0.0
        %1331 = vmatprep.subr.mxu0 %v1122
        %1332 = vmatpush1.msra.mxu0 %v1120
        %1333 = vmatprep.subr.mxu0 0.0
        %1334 = vmatpush2.msra.mxu0 0.0
        %1335 = vmatprep.subr.mxu0 0.0
        %1336 = vmatpush2.msra.mxu0 0.0
        %1337 = vmatprep.subr.mxu0 0.0
        %1338 = vmatpush2.msra.mxu0 0.0
        %1339 = vmatprep.subr.mxu0 0.0
        %1340 = vmatpush2.msra.mxu0 0.0
        %1341 = vmatprep.subr.mxu0 0.0
        %1342 = vmatpush2.msra.mxu0 0.0
        %1343 = vmatprep.subr.mxu0 0.0
        %1344 = vmatpush2.msra.mxu0 0.0
        %1345 = vmatprep.subr.mxu0 0.0
        %1346 = vmatpush2.msra.mxu0 0.0
        %1347 = vmatprep.subr.mxu0 0.0
        %1348 = vmatpush2.msra.mxu0 0.0
        %1349 = vmatprep.subr.mxu0 0.0
        %1350 = vmatpush2.msra.mxu0 0.0
        %1351 = vmatprep.subr.mxu0 0.0
        %1352 = vmatpush2.msra.mxu0 0.0
        %1353 = vmatprep.subr.mxu0 0.0
        %1354 = vmatpush2.msra.mxu0 0.0
        %1355 = vmatprep.subr.mxu0 0.0
        %1356 = vmatpush2.msra.mxu0 0.0
        %1357 = vmatprep.subr.mxu0 0.0
        %1358 = vmatpush2.msra.mxu0 0.0
        %1359 = vmatprep.subr.mxu0 0.0
        %1360 = vmatpush2.msra.mxu0 0.0
        %1361 = vmatprep.subr.mxu0 0.0
        %1362 = vmatpush2.msra.mxu0 0.0
        %1363 = vmatprep.subr.mxu0 0.0
        %1364 = vmatpush2.msra.mxu0 0.0
        %1365 = vmatprep.mubr.f32.mxu0 0.0
        %1366 = vmatmul.mubr.f32.gmra.mxu0 %v1158
        %v1367 = vpop.f32.mrf.mxu0
        %v1368 = vadd.f32 0.0, %v1367
        %v1369 = vpop.f32.mrf.mxu0
        %v1370 = vadd.f32 0.0, %v1369
        %1371 = vmatprep.mubr.f32.mxu0 0.0
        %1372 = vmatmul.mubr.f32.gmra.mxu0 %v1161
        %v1373 = vpop.f32.mrf.mxu0
        %v1374 = vadd.f32 0.0, %v1373
        %v1375 = vpop.f32.mrf.mxu0
        %v1376 = vadd.f32 0.0, %v1375
        %1377 = vmatprep.mubr.f32.mxu0 0.0
        %1378 = vmatmul.mubr.f32.gmra.mxu0 %v1164
        %v1379 = vpop.f32.mrf.mxu0
        %v1380 = vadd.f32 0.0, %v1379
        %v1381 = vpop.f32.mrf.mxu0
        %v1382 = vadd.f32 0.0, %v1381
        %1383 = vdwg.mxu0
        %v1384 = vmul.f32 %v1368, 2.0
        %v1385 = vmul.f32 %v1370, 2.0
        %v1386 = vmul.f32 %v1374, 2.0
        %v1387 = vmul.f32 %v1376, 2.0
        %v1388 = vmul.f32 %v1380, 2.0
        %v1389 = vmul.f32 %v1382, 2.0
        %v1390 = vsub.f32 %v1150, %v1384
        %v1391 = vsub.f32 %v1156, %v1385
        %v1392 = vsub.f32 %v1150, %v1386
        %v1393 = vsub.f32 %v1156, %v1387
        %v1394 = vsub.f32 %v1150, %v1388
        %v1395 = vsub.f32 %v1156, %v1389
        %v1396 = vadd.f32 %v1390, %v1264
        %v1397 = vadd.f32 %v1391, %v1264
        %v1398 = vadd.f32 %v1392, %v1269
        %v1399 = vadd.f32 %v1393, %v1269
        %v1400 = vadd.f32 %v1394, %v1274
        %v1401 = vadd.f32 %v1395, %v1274
        %v1402 = vmax.f32 %v1396, 0.0
        %v1403 = vmax.f32 %v1397, 0.0
        %v1404 = vmax.f32 %v1398, 0.0
        %v1405 = vmax.f32 %v1399, 0.0
        %v1406 = vmax.f32 %v1400, 0.0
        %v1407 = vmax.f32 %v1401, 0.0
        %v1408 = vmin.f32 %v1402, %v1403
        %1409 = vmin.xlane.f32.xlu0 %v1408
        %v1410 = vpop.xlane.xlu0 %1409
        %v1411 = vmin.f32 %v1404, %v1405
        %1412 = vmin.xlane.f32.xlu0 %v1411
        %v1413 = vpop.xlane.xlu0 %1412
        %v1414 = vmin.f32 %v1406, %v1407
        %1415 = vmin.xlane.f32.xlu0 %v1414
        %v1416 = vpop.xlane.xlu0 %1415
        %vm1417 = vcmask 15368
        %1418 = vst.msk [vmem:[%s407] sm:$0xff] %vm1417, %v1410
        %1419 = vst.msk [vmem:[%s407 + $0x8] sm:$0xff] %vm1417, %v1413
        %1420 = vst.msk [vmem:[%s407 + $0x10] sm:$0xff] %vm1417, %v1416
        %p1421 = scmp.lt.s32.totalorder %s25, 3
        %s1422 = scalar_select %p1421, %s25, 3
        %s1423 = smul.addr %s1422, 3
        %s1424 = smul.addr %s1423, 8
        %s1425 = scalar_lea.vmem %s11, %s1424
        // Predicated region
        $region69: #{tpu_custom_call.1} parent=63 // pred_check
          %p1426 = pneg %p279
        $region70: #{tpu_custom_call.1} parent=63 // pred_check_branch
          %1428 = sbr.rel (%p1426) target = $region72
        $region71: #{tpu_custom_call.1} parent=63 // pred_region
          _
        $region72: #{tpu_custom_call.1} parent=63 // pred_fallthru
          _
      $region64: #{tpu_custom_call.1} parent=5 // pred_fallthru
        _
      %p1429 = scmp.le.s32.totalorder 2, %s20
      // Predicated region
      $region73: #{tpu_custom_call.1} parent=5 // pred_check
        %p1430 = pneg %p1429
      $region74: #{tpu_custom_call.1} parent=5 // pred_check_branch
        %1432 = sbr.rel (%p1430) target = $region76
      $region75: #{tpu_custom_call.1} parent=5 // pred_region
        %s1433 = ssub.s32 %s20, 2
        // Predicated region
        $region77: #{tpu_custom_call.1} parent=75 // pred_check
          %p1434 = pneg %p285
        $region78: #{tpu_custom_call.1} parent=75 // pred_check_branch
          %1436 = sbr.rel (%p1434) target = $region80
        $region79: #{tpu_custom_call.1} parent=75 // pred_region
          %p1437 = scmp.lt.s32.totalorder %s26, 3
          %s1438 = scalar_select %p1437, %s26, 3
          %s1439 = smul.addr %s1438, 3
          %s1440 = smul.addr %s1439, 8
          %s1441 = scalar_lea.vmem %s11, %s1440
        $region80: #{tpu_custom_call.1} parent=75 // pred_fallthru
          _
      $region76: #{tpu_custom_call.1} parent=5 // pred_fallthru
        _
    $region6: #{tpu_custom_call.1} parent=1 // loop_footer
      %s24 = sadd.s32 1, %s20
    $region7: #{tpu_custom_call.1} parent=1 // loop_footer_branch
      %19 = sbr.rel target = $region3
    $region8: #{tpu_custom_call.1} parent=1 // loop_exit
      _
    %1442 = vsyncpa [#allocation3], 1
    %s1443 = scalar_lea.sflag [#allocation3], 1
    %1444 = vsyncpa %s1443, 1

</llo_original>
